<compile_context>
chip_gen: v7x
topology: tpu7x:2x2x1
jax: 0.10.0
libtpu: 0.0.40
codegen_flags: <defaults>
</compile_context>

<pallas_src>
import functools
import math

import jax
import jax.numpy as jnp
from jax.experimental import pallas as pl
from jax.experimental.pallas import tpu as pltpu

_VMEM_LIMIT_BYTES = 48 * 1024 * 1024


def _round_up(x, m):
    return ((x + m - 1) // m) * m


def _pick_tm(m):
    if m >= 4096:
        return 512
    if m >= 2048:
        return 256
    if m >= 1024:
        return 128
    # Small M: aim for ~4 blocks so both TensorCores get work on v7x.
    return max(8, min(_round_up(-(-m // 4), 8), 128))


def _pick_tr(ho):
    # Output-row tile for the depthwise conv; prefer 8 rows, must divide Ho.
    for tr in (8, 16, 4, 2):
        if tr <= ho and ho % tr == 0:
            return tr
    return ho


# -----------------------------------------------------------------------------
# Kernel 1: fused 1x1 conv == matmul + shift (+ PReLU | + residual).
# BN scale is pre-folded into the weight columns; bf16 operands, f32 MXU acc.
# -----------------------------------------------------------------------------
def _mm_shift_kernel(a_ref, w_ref, shift_ref, o_ref):
    acc = jnp.dot(a_ref[...], w_ref[...], preferred_element_type=jnp.float32)
    o_ref[...] = (acc + shift_ref[...]).astype(o_ref.dtype)


def _mm_shift_prelu_kernel(a_ref, w_ref, shift_ref, slope_ref, o_ref):
    acc = jnp.dot(a_ref[...], w_ref[...], preferred_element_type=jnp.float32)
    y = acc + shift_ref[...]
    o_ref[...] = jnp.where(y > 0, y, y * slope_ref[...]).astype(o_ref.dtype)


def _mm_shift_res_kernel(a_ref, w_ref, shift_ref, res_ref, o_ref):
    acc = jnp.dot(a_ref[...], w_ref[...], preferred_element_type=jnp.float32)
    y = acc + shift_ref[...] + res_ref[...].astype(jnp.float32)
    o_ref[...] = y.astype(o_ref.dtype)


def matmul_bn_act(a, w, scale, shift, *, slope=None, residual=None,
                  out_dtype=jnp.float32):
    """y = act((a @ (w*scale)) + shift) [+ residual];  a:(M,K), w:(K,N)."""
    M, K = a.shape
    K2, N = w.shape
    assert K == K2
    assert not (slope is not None and residual is not None)

    a_b = a.astype(jnp.bfloat16)
    # Fold BN scale into the weight columns (tiny tensor, done once per call).
    w_b = (w.astype(jnp.float32) * scale.astype(jnp.float32)[None, :]).astype(
        jnp.bfloat16)
    shift2 = shift.astype(jnp.float32).reshape(1, N)

    tm = _pick_tm(M)
    if N % 256 == 0 and N > 256:
        tn = 256
    elif N % 128 == 0 and N > 128:
        tn = 128
    else:
        tn = N
    grid = (pl.cdiv(M, tm), pl.cdiv(N, tn))

    vec_spec = pl.BlockSpec((1, tn), lambda i, j: (0, j))
    tile_spec = pl.BlockSpec((tm, tn), lambda i, j: (i, j))
    in_specs = [
        pl.BlockSpec((tm, K), lambda i, j: (i, 0)),   # full-K block, no padding
        pl.BlockSpec((K, tn), lambda i, j: (0, j)),
        vec_spec,
    ]
    args = [a_b, w_b, shift2]
    if slope is not None:
        kernel = _mm_shift_prelu_kernel
        in_specs.append(vec_spec)
        args.append(slope.astype(jnp.float32).reshape(1, N))
    elif residual is not None:
        kernel = _mm_shift_res_kernel
        in_specs.append(tile_spec)
        args.append(residual.astype(jnp.float32))
    else:
        kernel = _mm_shift_kernel

    return pl.pallas_call(
        kernel,
        out_shape=jax.ShapeDtypeStruct((M, N), out_dtype),
        grid_spec=pltpu.PrefetchScalarGridSpec(
            num_scalar_prefetch=0,
            grid=grid,
            in_specs=in_specs,
            out_specs=pl.BlockSpec((tm, tn), lambda i, j: (i, j)),
        ),
        compiler_params=pltpu.CompilerParams(
            dimension_semantics=("parallel", "parallel"),
            vmem_limit_bytes=_VMEM_LIMIT_BYTES),
    )(*args)


# -----------------------------------------------------------------------------
# Kernel 2: depthwise 3x3 conv + BN + PReLU, NHWC, stride applied IN-kernel.
# Grid = (batch, channel tiles, output-row tiles).  The zero-padded image lives
# in a VMEM scratch filled once per (batch, channel-tile); no XLA pad pass.
# -----------------------------------------------------------------------------
def _dw_kernel(x_ref, w_ref, shift_ref, slope_ref, o_ref, pad_ref, *,
               kh, kw, stride):
    _, H, W, tc = x_ref.shape
    _, tr, Wo, _ = o_ref.shape

    # Row-tile axis is innermost, so the (b, c) image block is resident across
    # it: build the zero-padded copy only on the first row tile.
    @pl.when(pl.program_id(2) == 0)
    def _():
        pad_ref[...] = jnp.zeros_like(pad_ref)
        pad_ref[pl.ds(1, H), pl.ds(1, W), :] = x_ref[0].astype(pad_ref.dtype)

    r0 = pl.multiple_of(pl.program_id(2) * (tr * stride), tr * stride)
    acc = jnp.zeros((tr, Wo, tc), jnp.float32)
    for i in range(kh):
        for j in range(kw):
            if stride == 1:
                xs = pad_ref[pl.ds(r0 + i, tr), pl.ds(j, Wo), :]
            else:
                xs = pad_ref[pl.ds(r0 + i, tr, stride=stride),
                             pl.ds(j, Wo, stride=stride), :]
            acc = acc + xs * w_ref[i, j, :]
    y = acc + shift_ref[...]
    y = jnp.where(y > 0, y, y * slope_ref[...])
    o_ref[0] = y.astype(o_ref.dtype)


def depthwise_conv_bn_prelu(x, w, scale, shift, slope, *, stride=1,
                            out_dtype=jnp.bfloat16):
    """x: (B, H, W, C) NHWC; w: (kh, kw, C); BN scale folded into w."""
    B, H, W, C = x.shape
    kh, kw, _ = w.shape
    pad = 1
    Hp, Wp = H + 2 * pad, W + 2 * pad
    Ho = (Hp - kh) // stride + 1
    Wo = (Wp - kw) // stride + 1

    tc = 128 if C % 128 == 0 else C
    tr = _pick_tr(Ho)
    grid = (B, C // tc, Ho // tr)

    w_f = w.astype(jnp.float32) * scale.astype(jnp.float32)[None, None, :]
    shift3 = shift.astype(jnp.float32).reshape(1, 1, C)
    slope3 = slope.astype(jnp.float32).reshape(1, 1, C)
    vec_spec = pl.BlockSpec((1, 1, tc), lambda b, c, r: (0, 0, c))

    return pl.pallas_call(
        functools.partial(_dw_kernel, kh=kh, kw=kw, stride=stride),
        out_shape=jax.ShapeDtypeStruct((B, Ho, Wo, C), out_dtype),
        grid_spec=pltpu.PrefetchScalarGridSpec(
            num_scalar_prefetch=0,
            grid=grid,
            in_specs=[
                pl.BlockSpec((1, H, W, tc), lambda b, c, r: (b, 0, 0, c)),
                pl.BlockSpec((kh, kw, tc), lambda b, c, r: (0, 0, c)),
                vec_spec, vec_spec,
            ],
            out_specs=pl.BlockSpec((1, tr, Wo, tc), lambda b, c, r: (b, r, 0, c)),
            scratch_shapes=[pltpu.VMEM((Hp, Wp, tc), jnp.float32)],
        ),
        compiler_params=pltpu.CompilerParams(
            dimension_semantics=("parallel", "parallel", "arbitrary"),
            vmem_limit_bytes=_VMEM_LIMIT_BYTES),
    )(x.astype(jnp.bfloat16), w_f, shift3, slope3)


# -----------------------------------------------------------------------------
# Parameters (deterministic, synthetic) and BN folding
# -----------------------------------------------------------------------------
def fold_bn(gamma, beta, mean, var, eps=1e-5):
    scale = gamma / jnp.sqrt(var + eps)
    shift = beta - mean * scale
    return scale, shift


def make_bottleneck_params(key, inp, oup, expansion, eps=1e-5):
    mid = inp * expansion
    keys = iter(jax.random.split(key, 8))

    def conv_w(shape, fan_in):
        return jax.random.normal(next(keys), shape, jnp.float32) * math.sqrt(2.0 / fan_in)

    def bn_init(c):
        # nn.BatchNorm2d __init__ state: gamma=1, beta=0, mean=0, var=1.
        return fold_bn(jnp.ones((c,), jnp.float32), jnp.zeros((c,), jnp.float32),
                       jnp.zeros((c,), jnp.float32), jnp.ones((c,), jnp.float32), eps)

    pw1 = {"w": conv_w((inp, mid), inp)}                       # 1x1 conv (inp -> mid)
    pw1["bn_s"], pw1["bn_b"] = bn_init(mid)
    pw1["prelu"] = jnp.full((mid,), 0.25, jnp.float32)

    dw = {"w": conv_w((3, 3, mid), 9)}                         # 3x3 depthwise
    dw["bn_s"], dw["bn_b"] = bn_init(mid)
    dw["prelu"] = jnp.full((mid,), 0.25, jnp.float32)

    pw2 = {"w": conv_w((mid, oup), mid)}                       # 1x1 linear conv
    pw2["bn_s"], pw2["bn_b"] = bn_init(oup)
    return {"pw1": pw1, "dw": dw, "pw2": pw2}


# -----------------------------------------------------------------------------
# Bottleneck forward (NCHW in / NCHW out, matching the PyTorch module)
# -----------------------------------------------------------------------------
def bottleneck_forward(params, x_nchw, *, stride):
    pw1, dw, pw2 = params["pw1"], params["dw"], params["pw2"]
    inp, mid = pw1["w"].shape
    oup = pw2["w"].shape[1]
    connect = (stride == 1 and inp == oup)

    B, _, H, W = x_nchw.shape
    x = jnp.transpose(x_nchw, (0, 2, 3, 1))                    # NCHW -> NHWC (f32)

    # 1x1 conv + BN + PReLU (bf16 output feeds the depthwise kernel directly)
    h = matmul_bn_act(x.reshape(B * H * W, inp), pw1["w"],
                      pw1["bn_s"], pw1["bn_b"], slope=pw1["prelu"],
                      out_dtype=jnp.bfloat16).reshape(B, H, W, mid)

    # 3x3 depthwise conv (pad + stride inside the kernel) + BN + PReLU
    h = depthwise_conv_bn_prelu(h, dw["w"], dw["bn_s"], dw["bn_b"], dw["prelu"],
                                stride=stride, out_dtype=jnp.bfloat16)
    Bo, Ho, Wo, _ = h.shape

    # 1x1 linear conv + BN, with the residual add fused into the epilogue.
    res = x.reshape(B * H * W, inp) if connect else None
    y = matmul_bn_act(h.reshape(Bo * Ho * Wo, mid), pw2["w"],
                      pw2["bn_s"], pw2["bn_b"], residual=res,
                      out_dtype=jnp.float32).reshape(Bo, Ho, Wo, oup)

    return jnp.transpose(y, (0, 3, 1, 2))                      # NHWC -> NCHW


# -----------------------------------------------------------------------------
# Pure-JAX f32 reference (correctness check)
# -----------------------------------------------------------------------------
def bottleneck_reference(params, x_nchw, *, stride):
    pw1, dw, pw2 = params["pw1"], params["dw"], params["pw2"]
    inp, oup = pw1["w"].shape[0], pw2["w"].shape[1]
    connect = (stride == 1 and inp == oup)
    x = jnp.transpose(x_nchw, (0, 2, 3, 1)).astype(jnp.float32)

    h = jnp.einsum("bhwc,cd->bhwd", x, pw1["w"]) * pw1["bn_s"] + pw1["bn_b"]
    h = jnp.where(h > 0, h, h * pw1["prelu"])

    hp = jnp.pad(h, ((0, 0), (1, 1), (1, 1), (0, 0)))
    Hp, Wp = hp.shape[1], hp.shape[2]
    Ho = (Hp - 3) // stride + 1
    Wo = (Wp - 3) // stride + 1
    acc = jnp.zeros((h.shape[0], Ho, Wo, h.shape[3]), jnp.float32)
    for i in range(3):
        for j in range(3):
            acc = acc + hp[:, i:i + (Ho - 1) * stride + 1:stride,
                           j:j + (Wo - 1) * stride + 1:stride, :] * dw["w"][i, j]
    h = acc * dw["bn_s"] + dw["bn_b"]
    h = jnp.where(h > 0, h, h * dw["prelu"])

    h = jnp.einsum("bhwc,cd->bhwd", h, pw2["w"]) * pw2["bn_s"] + pw2["bn_b"]
    if connect:
        h = x + h
    return jnp.transpose(h, (0, 3, 1, 2))


if __name__ == "__main__":
    key = jax.random.PRNGKey(0)
    kp1, kp2, kx1, kx2 = jax.random.split(key, 4)
    B, H, W = 2, 16, 16

    def check(y, ref):
        assert bool(jnp.all(jnp.isfinite(y)))
        err = float(jnp.max(jnp.abs(y - ref)))
        denom = max(1.0, float(jnp.max(jnp.abs(ref))))
        assert err / denom < 5e-2, (err, denom)

    # Case 1: residual path (stride=1, inp == oup)
    inp, oup, stride, expansion = 32, 32, 1, 2
    params1 = make_bottleneck_params(kp1, inp, oup, expansion)
    x1 = jax.random.normal(kx1, (B, inp, H, W), jnp.float32)
    fwd1 = jax.jit(functools.partial(bottleneck_forward, stride=stride))
    y1 = fwd1(params1, x1)
    jax.block_until_ready(y1)
    assert y1.shape == (B, oup, H, W)
    check(y1, bottleneck_reference(params1, x1, stride=stride))

    # Case 2: downsample path (stride=2, inp != oup -> no residual)
    inp, oup, stride, expansion = 32, 64, 2, 2
    params2 = make_bottleneck_params(kp2, inp, oup, expansion)
    x2 = jax.random.normal(kx2, (B, inp, H, W), jnp.float32)
    fwd2 = jax.jit(functools.partial(bottleneck_forward, stride=stride))
    y2 = fwd2(params2, x2)
    jax.block_until_ready(y2)
    assert y2.shape == (B, oup, H // 2, W // 2)
    check(y2, bottleneck_reference(params2, x2, stride=stride))

    print("KERNEL_OK")
</pallas_src>

<mosaic_0001>
module attributes {stable_mosaic.version = 11 : i64} {
  func.func @_mm_shift_prelu_kernel(%arg0: i32, %arg1: i32, %arg2: memref<128x32xbf16, #tpu.memory_space<vmem>>, %arg3: memref<32x64xbf16, #tpu.memory_space<vmem>>, %arg4: memref<1x64xf32, #tpu.memory_space<vmem>>, %arg5: memref<1x64xf32, #tpu.memory_space<vmem>>, %arg6: memref<128x64xbf16, #tpu.memory_space<vmem>>) attributes {dimension_semantics = [#tpu.dimension_semantics<parallel>, #tpu.dimension_semantics<parallel>], iteration_bounds = array<i64: 4, 1>, scalar_prefetch = 0 : i64, scratch_operands = 0 : i64, tpu.core_type = #tpu.core_type<tc>, window_params = [{transform_indices = @transform_0, window_bounds = array<i64: 128, 32>}, {transform_indices = @transform_1, window_bounds = array<i64: 32, 64>}, {transform_indices = @transform_2, window_bounds = array<i64: 1, 64>}, {transform_indices = @transform_3, window_bounds = array<i64: 1, 64>}, {transform_indices = @transform_4, window_bounds = array<i64: 128, 64>}]} {
    %c0 = arith.constant 0 : index
    %c0_0 = arith.constant 0 : index
    %0 = vector.load %arg2[%c0, %c0_0] : memref<128x32xbf16, #tpu.memory_space<vmem>>, vector<128x32xbf16>
    %c0_1 = arith.constant 0 : index
    %c0_2 = arith.constant 0 : index
    %1 = vector.load %arg3[%c0_1, %c0_2] : memref<32x64xbf16, #tpu.memory_space<vmem>>, vector<32x64xbf16>
    %cst = arith.constant dense<0.000000e+00> : vector<128x64xf32>
    %2 = tpu.matmul %0, %1, %cst {dimension_numbers = #tpu.dot_dimension_numbers<[1], [0], [0], [1], [0, 0, 1, 1], [], []>} : vector<128x32xbf16>, vector<32x64xbf16>, vector<128x64xf32> -> vector<128x64xf32>
    %c0_3 = arith.constant 0 : index
    %c0_4 = arith.constant 0 : index
    %3 = vector.load %arg4[%c0_3, %c0_4] : memref<1x64xf32, #tpu.memory_space<vmem>>, vector<1x64xf32>
    %4 = vector.broadcast %3 : vector<1x64xf32> to vector<128x64xf32>
    %5 = arith.addf %2, %4 : vector<128x64xf32>
    %cst_5 = arith.constant 0.000000e+00 : f32
    %6 = vector.broadcast %cst_5 : f32 to vector<128x64xf32>
    %7 = arith.cmpf ogt, %5, %6 : vector<128x64xf32>
    %c0_6 = arith.constant 0 : index
    %c0_7 = arith.constant 0 : index
    %8 = vector.load %arg5[%c0_6, %c0_7] : memref<1x64xf32, #tpu.memory_space<vmem>>, vector<1x64xf32>
    %9 = vector.broadcast %8 : vector<1x64xf32> to vector<128x64xf32>
    %10 = arith.mulf %5, %9 : vector<128x64xf32>
    %11 = arith.select %7, %5, %10 : vector<128x64xi1>, vector<128x64xf32>
    %12 = arith.truncf %11 : vector<128x64xf32> to vector<128x64xbf16>
    %c0_8 = arith.constant 0 : index
    %c0_9 = arith.constant 0 : index
    %13 = vector.load %arg6[%c0_8, %c0_9] : memref<128x64xbf16, #tpu.memory_space<vmem>>, vector<128x64xbf16>
    tpu.vector_store %arg6[%c0_8, %c0_9], %12 {strides = array<i32>} : memref<128x64xbf16, #tpu.memory_space<vmem>>, vector<128x64xbf16>,
    return
  }
  func.func @transform_0(%arg0: i32, %arg1: i32) -> (i32, i32) {
    %c0_i32 = arith.constant 0 : i32
    %c0_i32_0 = arith.constant 0 : i32
    return %arg0, %c0_i32 : i32, i32
  }
  func.func @transform_1(%arg0: i32, %arg1: i32) -> (i32, i32) {
    %c0_i32 = arith.constant 0 : i32
    %c0_i32_0 = arith.constant 0 : i32
    return %c0_i32, %arg1 : i32, i32
  }
  func.func @transform_2(%arg0: i32, %arg1: i32) -> (i32, i32) {
    %c0_i32 = arith.constant 0 : i32
    %c0_i32_0 = arith.constant 0 : i32
    return %c0_i32, %arg1 : i32, i32
  }
  func.func @transform_3(%arg0: i32, %arg1: i32) -> (i32, i32) {
    %c0_i32 = arith.constant 0 : i32
    %c0_i32_0 = arith.constant 0 : i32
    return %c0_i32, %arg1 : i32, i32
  }
  func.func @transform_4(%arg0: i32, %arg1: i32) -> (i32, i32) {
    %c0_i32 = arith.constant 0 : i32
    return %arg0, %arg1 : i32, i32
  }
}

module attributes {stable_mosaic.version = 11 : i64} {
  func.func @_mm_shift_res_kernel(%arg0: i32, %arg1: i32, %arg2: memref<128x64xbf16, #tpu.memory_space<vmem>>, %arg3: memref<64x32xbf16, #tpu.memory_space<vmem>>, %arg4: memref<1x32xf32, #tpu.memory_space<vmem>>, %arg5: memref<128x32xf32, #tpu.memory_space<vmem>>, %arg6: memref<128x32xf32, #tpu.memory_space<vmem>>) attributes {dimension_semantics = [#tpu.dimension_semantics<parallel>, #tpu.dimension_semantics<parallel>], iteration_bounds = array<i64: 4, 1>, scalar_prefetch = 0 : i64, scratch_operands = 0 : i64, tpu.core_type = #tpu.core_type<tc>, window_params = [{transform_indices = @transform_0, window_bounds = array<i64: 128, 64>}, {transform_indices = @transform_1, window_bounds = array<i64: 64, 32>}, {transform_indices = @transform_2, window_bounds = array<i64: 1, 32>}, {transform_indices = @transform_3, window_bounds = array<i64: 128, 32>}, {transform_indices = @transform_4, window_bounds = array<i64: 128, 32>}]} {
    %c0 = arith.constant 0 : index
    %c0_0 = arith.constant 0 : index
    %0 = vector.load %arg2[%c0, %c0_0] : memref<128x64xbf16, #tpu.memory_space<vmem>>, vector<128x64xbf16>
    %c0_1 = arith.constant 0 : index
    %c0_2 = arith.constant 0 : index
    %1 = vector.load %arg3[%c0_1, %c0_2] : memref<64x32xbf16, #tpu.memory_space<vmem>>, vector<64x32xbf16>
    %cst = arith.constant dense<0.000000e+00> : vector<128x32xf32>
    %2 = tpu.matmul %0, %1, %cst {dimension_numbers = #tpu.dot_dimension_numbers<[1], [0], [0], [1], [0, 0, 1, 1], [], []>} : vector<128x64xbf16>, vector<64x32xbf16>, vector<128x32xf32> -> vector<128x32xf32>
    %c0_3 = arith.constant 0 : index
    %c0_4 = arith.constant 0 : index
    %3 = vector.load %arg4[%c0_3, %c0_4] : memref<1x32xf32, #tpu.memory_space<vmem>>, vector<1x32xf32>
    %4 = vector.broadcast %3 : vector<1x32xf32> to vector<128x32xf32>
    %5 = arith.addf %2, %4 : vector<128x32xf32>
    %c0_5 = arith.constant 0 : index
    %c0_6 = arith.constant 0 : index
    %6 = vector.load %arg5[%c0_5, %c0_6] : memref<128x32xf32, #tpu.memory_space<vmem>>, vector<128x32xf32>
    %7 = arith.addf %5, %6 : vector<128x32xf32>
    %c0_7 = arith.constant 0 : index
    %c0_8 = arith.constant 0 : index
    %8 = vector.load %arg6[%c0_7, %c0_8] : memref<128x32xf32, #tpu.memory_space<vmem>>, vector<128x32xf32>
    tpu.vector_store %arg6[%c0_7, %c0_8], %7 {strides = array<i32>} : memref<128x32xf32, #tpu.memory_space<vmem>>, vector<128x32xf32>,
    return
  }
  func.func @transform_0(%arg0: i32, %arg1: i32) -> (i32, i32) {
    %c0_i32 = arith.constant 0 : i32
    %c0_i32_0 = arith.constant 0 : i32
    return %arg0, %c0_i32 : i32, i32
  }
  func.func @transform_1(%arg0: i32, %arg1: i32) -> (i32, i32) {
    %c0_i32 = arith.constant 0 : i32
    %c0_i32_0 = arith.constant 0 : i32
    return %c0_i32, %arg1 : i32, i32
  }
  func.func @transform_2(%arg0: i32, %arg1: i32) -> (i32, i32) {
    %c0_i32 = arith.constant 0 : i32
    %c0_i32_0 = arith.constant 0 : i32
    return %c0_i32, %arg1 : i32, i32
  }
  func.func @transform_3(%arg0: i32, %arg1: i32) -> (i32, i32) {
    %c0_i32 = arith.constant 0 : i32
    return %arg0, %arg1 : i32, i32
  }
  func.func @transform_4(%arg0: i32, %arg1: i32) -> (i32, i32) {
    %c0_i32 = arith.constant 0 : i32
    return %arg0, %arg1 : i32, i32
  }
}

module attributes {stable_mosaic.version = 11 : i64} {
  func.func @_dw_kernel(%arg0: i32, %arg1: i32, %arg2: i32, %arg3: memref<1x16x16x64xbf16, #tpu.memory_space<vmem>>, %arg4: memref<3x3x64xf32, #tpu.memory_space<vmem>>, %arg5: memref<1x1x64xf32, #tpu.memory_space<vmem>>, %arg6: memref<1x1x64xf32, #tpu.memory_space<vmem>>, %arg7: memref<1x8x16x64xbf16, #tpu.memory_space<vmem>>, %arg8: memref<18x18x64xf32, #tpu.memory_space<vmem>>) attributes {dimension_semantics = [#tpu.dimension_semantics<parallel>, #tpu.dimension_semantics<parallel>, #tpu.dimension_semantics<arbitrary>], iteration_bounds = array<i64: 2, 1, 2>, scalar_prefetch = 0 : i64, scratch_operands = 1 : i64, tpu.core_type = #tpu.core_type<tc>, window_params = [{transform_indices = @transform_0, window_bounds = array<i64: 1, 16, 16, 64>}, {transform_indices = @transform_1, window_bounds = array<i64: 3, 3, 64>}, {transform_indices = @transform_2, window_bounds = array<i64: 1, 1, 64>}, {transform_indices = @transform_3, window_bounds = array<i64: 1, 1, 64>}, {transform_indices = @transform_4, window_bounds = array<i64: 1, 8, 16, 64>}]} {
    %c0_i32 = arith.constant 0 : i32
    %0 = arith.cmpi eq, %arg2, %c0_i32 : i32
    %1 = arith.extui %0 : i1 to i32
    %c0_i32_0 = arith.constant 0 : i32
    %2 = arith.cmpi ne, %1, %c0_i32_0 : i32
    scf.if %2 {
      %cst_61 = arith.constant 0.000000e+00 : f32
      %100 = vector.broadcast %cst_61 : f32 to vector<18x18x64xf32>
      %c0_62 = arith.constant 0 : index
      %c0_63 = arith.constant 0 : index
      %c0_64 = arith.constant 0 : index
      %101 = vector.load %arg8[%c0_62, %c0_63, %c0_64] : memref<18x18x64xf32, #tpu.memory_space<vmem>>, vector<18x18x64xf32>
      tpu.vector_store %arg8[%c0_62, %c0_63, %c0_64], %100 {strides = array<i32>} : memref<18x18x64xf32, #tpu.memory_space<vmem>>, vector<18x18x64xf32>,
      %c0_65 = arith.constant 0 : index
      %c0_66 = arith.constant 0 : index
      %c0_67 = arith.constant 0 : index
      %c0_68 = arith.constant 0 : index
      %102 = vector.load %arg3[%c0_65, %c0_66, %c0_67, %c0_68] : memref<1x16x16x64xbf16, #tpu.memory_space<vmem>>, vector<1x16x16x64xbf16>
      %103 = vector.shape_cast %102 : vector<1x16x16x64xbf16> to vector<16x16x64xbf16>
      %104 = arith.extf %103 : vector<16x16x64xbf16> to vector<16x16x64xf32>
      %c1_69 = arith.constant 1 : index
      %c1_70 = arith.constant 1 : index
      %c0_71 = arith.constant 0 : index
      %105 = vector.load %arg8[%c1_69, %c1_70, %c0_71] : memref<18x18x64xf32, #tpu.memory_space<vmem>>, vector<16x16x64xf32>
      tpu.vector_store %arg8[%c1_69, %c1_70, %c0_71], %104 {strides = array<i32>} : memref<18x18x64xf32, #tpu.memory_space<vmem>>, vector<16x16x64xf32>,
    } else {
    }
    %c8_i32 = arith.constant 8 : i32
    %3 = arith.muli %arg2, %c8_i32 : i32
    %4 = tpu.assume_multiple %3, 8 : i32
    %cst = arith.constant 0.000000e+00 : f32
    %5 = vector.broadcast %cst : f32 to vector<8x16x64xf32>
    %c0_i32_1 = arith.constant 0 : i32
    %6 = arith.addi %4, %c0_i32_1 : i32
    %7 = arith.index_cast %6 : i32 to index
    %c0 = arith.constant 0 : index
    %c0_2 = arith.constant 0 : index
    %8 = vector.load %arg8[%7, %c0, %c0_2] : memref<18x18x64xf32, #tpu.memory_space<vmem>>, vector<8x16x64xf32>
    %c0_3 = arith.constant 0 : index
    %c0_4 = arith.constant 0 : index
    %c0_5 = arith.constant 0 : index
    %9 = vector.load %arg4[%c0_3, %c0_4, %c0_5] : memref<3x3x64xf32, #tpu.memory_space<vmem>>, vector<1x1x64xf32>
    %10 = vector.shape_cast %9 : vector<1x1x64xf32> to vector<64xf32>
    %11 = vector.shape_cast %10 : vector<64xf32> to vector<1x1x64xf32>
    %12 = vector.broadcast %11 : vector<1x1x64xf32> to vector<8x16x64xf32>
    %13 = arith.mulf %8, %12 : vector<8x16x64xf32>
    %14 = arith.addf %5, %13 : vector<8x16x64xf32>
    %c0_i32_6 = arith.constant 0 : i32
    %15 = arith.addi %4, %c0_i32_6 : i32
    %16 = arith.index_cast %15 : i32 to index
    %c1 = arith.constant 1 : index
    %c0_7 = arith.constant 0 : index
    %17 = vector.load %arg8[%16, %c1, %c0_7] : memref<18x18x64xf32, #tpu.memory_space<vmem>>, vector<8x16x64xf32>
    %c0_8 = arith.constant 0 : index
    %c1_9 = arith.constant 1 : index
    %c0_10 = arith.constant 0 : index
    %18 = vector.load %arg4[%c0_8, %c1_9, %c0_10] : memref<3x3x64xf32, #tpu.memory_space<vmem>>, vector<1x1x64xf32>
    %19 = vector.shape_cast %18 : vector<1x1x64xf32> to vector<64xf32>
    %20 = vector.shape_cast %19 : vector<64xf32> to vector<1x1x64xf32>
    %21 = vector.broadcast %20 : vector<1x1x64xf32> to vector<8x16x64xf32>
    %22 = arith.mulf %17, %21 : vector<8x16x64xf32>
    %23 = arith.addf %14, %22 : vector<8x16x64xf32>
    %c0_i32_11 = arith.constant 0 : i32
    %24 = arith.addi %4, %c0_i32_11 : i32
    %25 = arith.index_cast %24 : i32 to index
    %c2 = arith.constant 2 : index
    %c0_12 = arith.constant 0 : index
    %26 = vector.load %arg8[%25, %c2, %c0_12] : memref<18x18x64xf32, #tpu.memory_space<vmem>>, vector<8x16x64xf32>
    %c0_13 = arith.constant 0 : index
    %c2_14 = arith.constant 2 : index
    %c0_15 = arith.constant 0 : index
    %27 = vector.load %arg4[%c0_13, %c2_14, %c0_15] : memref<3x3x64xf32, #tpu.memory_space<vmem>>, vector<1x1x64xf32>
    %28 = vector.shape_cast %27 : vector<1x1x64xf32> to vector<64xf32>
    %29 = vector.shape_cast %28 : vector<64xf32> to vector<1x1x64xf32>
    %30 = vector.broadcast %29 : vector<1x1x64xf32> to vector<8x16x64xf32>
    %31 = arith.mulf %26, %30 : vector<8x16x64xf32>
    %32 = arith.addf %23, %31 : vector<8x16x64xf32>
    %c1_i32 = arith.constant 1 : i32
    %33 = arith.addi %4, %c1_i32 : i32
    %34 = arith.index_cast %33 : i32 to index
    %c0_16 = arith.constant 0 : index
    %c0_17 = arith.constant 0 : index
    %35 = vector.load %arg8[%34, %c0_16, %c0_17] : memref<18x18x64xf32, #tpu.memory_space<vmem>>, vector<8x16x64xf32>
    %c1_18 = arith.constant 1 : index
    %c0_19 = arith.constant 0 : index
    %c0_20 = arith.constant 0 : index
    %36 = vector.load %arg4[%c1_18, %c0_19, %c0_20] : memref<3x3x64xf32, #tpu.memory_space<vmem>>, vector<1x1x64xf32>
    %37 = vector.shape_cast %36 : vector<1x1x64xf32> to vector<64xf32>
    %38 = vector.shape_cast %37 : vector<64xf32> to vector<1x1x64xf32>
    %39 = vector.broadcast %38 : vector<1x1x64xf32> to vector<8x16x64xf32>
    %40 = arith.mulf %35, %39 : vector<8x16x64xf32>
    %41 = arith.addf %32, %40 : vector<8x16x64xf32>
    %c1_i32_21 = arith.constant 1 : i32
    %42 = arith.addi %4, %c1_i32_21 : i32
    %43 = arith.index_cast %42 : i32 to index
    %c1_22 = arith.constant 1 : index
    %c0_23 = arith.constant 0 : index
    %44 = vector.load %arg8[%43, %c1_22, %c0_23] : memref<18x18x64xf32, #tpu.memory_space<vmem>>, vector<8x16x64xf32>
    %c1_24 = arith.constant 1 : index
    %c1_25 = arith.constant 1 : index
    %c0_26 = arith.constant 0 : index
    %45 = vector.load %arg4[%c1_24, %c1_25, %c0_26] : memref<3x3x64xf32, #tpu.memory_space<vmem>>, vector<1x1x64xf32>
    %46 = vector.shape_cast %45 : vector<1x1x64xf32> to vector<64xf32>
    %47 = vector.shape_cast %46 : vector<64xf32> to vector<1x1x64xf32>
    %48 = vector.broadcast %47 : vector<1x1x64xf32> to vector<8x16x64xf32>
    %49 = arith.mulf %44, %48 : vector<8x16x64xf32>
    %50 = arith.addf %41, %49 : vector<8x16x64xf32>
    %c1_i32_27 = arith.constant 1 : i32
    %51 = arith.addi %4, %c1_i32_27 : i32
    %52 = arith.index_cast %51 : i32 to index
    %c2_28 = arith.constant 2 : index
    %c0_29 = arith.constant 0 : index
    %53 = vector.load %arg8[%52, %c2_28, %c0_29] : memref<18x18x64xf32, #tpu.memory_space<vmem>>, vector<8x16x64xf32>
    %c1_30 = arith.constant 1 : index
    %c2_31 = arith.constant 2 : index
    %c0_32 = arith.constant 0 : index
    %54 = vector.load %arg4[%c1_30, %c2_31, %c0_32] : memref<3x3x64xf32, #tpu.memory_space<vmem>>, vector<1x1x64xf32>
    %55 = vector.shape_cast %54 : vector<1x1x64xf32> to vector<64xf32>
    %56 = vector.shape_cast %55 : vector<64xf32> to vector<1x1x64xf32>
    %57 = vector.broadcast %56 : vector<1x1x64xf32> to vector<8x16x64xf32>
    %58 = arith.mulf %53, %57 : vector<8x16x64xf32>
    %59 = arith.addf %50, %58 : vector<8x16x64xf32>
    %c2_i32 = arith.constant 2 : i32
    %60 = arith.addi %4, %c2_i32 : i32
    %61 = arith.index_cast %60 : i32 to index
    %c0_33 = arith.constant 0 : index
    %c0_34 = arith.constant 0 : index
    %62 = vector.load %arg8[%61, %c0_33, %c0_34] : memref<18x18x64xf32, #tpu.memory_space<vmem>>, vector<8x16x64xf32>
    %c2_35 = arith.constant 2 : index
    %c0_36 = arith.constant 0 : index
    %c0_37 = arith.constant 0 : index
    %63 = vector.load %arg4[%c2_35, %c0_36, %c0_37] : memref<3x3x64xf32, #tpu.memory_space<vmem>>, vector<1x1x64xf32>
    %64 = vector.shape_cast %63 : vector<1x1x64xf32> to vector<64xf32>
    %65 = vector.shape_cast %64 : vector<64xf32> to vector<1x1x64xf32>
    %66 = vector.broadcast %65 : vector<1x1x64xf32> to vector<8x16x64xf32>
    %67 = arith.mulf %62, %66 : vector<8x16x64xf32>
    %68 = arith.addf %59, %67 : vector<8x16x64xf32>
    %c2_i32_38 = arith.constant 2 : i32
    %69 = arith.addi %4, %c2_i32_38 : i32
    %70 = arith.index_cast %69 : i32 to index
    %c1_39 = arith.constant 1 : index
    %c0_40 = arith.constant 0 : index
    %71 = vector.load %arg8[%70, %c1_39, %c0_40] : memref<18x18x64xf32, #tpu.memory_space<vmem>>, vector<8x16x64xf32>
    %c2_41 = arith.constant 2 : index
    %c1_42 = arith.constant 1 : index
    %c0_43 = arith.constant 0 : index
    %72 = vector.load %arg4[%c2_41, %c1_42, %c0_43] : memref<3x3x64xf32, #tpu.memory_space<vmem>>, vector<1x1x64xf32>
    %73 = vector.shape_cast %72 : vector<1x1x64xf32> to vector<64xf32>
    %74 = vector.shape_cast %73 : vector<64xf32> to vector<1x1x64xf32>
    %75 = vector.broadcast %74 : vector<1x1x64xf32> to vector<8x16x64xf32>
    %76 = arith.mulf %71, %75 : vector<8x16x64xf32>
    %77 = arith.addf %68, %76 : vector<8x16x64xf32>
    %c2_i32_44 = arith.constant 2 : i32
    %78 = arith.addi %4, %c2_i32_44 : i32
    %79 = arith.index_cast %78 : i32 to index
    %c2_45 = arith.constant 2 : index
    %c0_46 = arith.constant 0 : index
    %80 = vector.load %arg8[%79, %c2_45, %c0_46] : memref<18x18x64xf32, #tpu.memory_space<vmem>>, vector<8x16x64xf32>
    %c2_47 = arith.constant 2 : index
    %c2_48 = arith.constant 2 : index
    %c0_49 = arith.constant 0 : index
    %81 = vector.load %arg4[%c2_47, %c2_48, %c0_49] : memref<3x3x64xf32, #tpu.memory_space<vmem>>, vector<1x1x64xf32>
    %82 = vector.shape_cast %81 : vector<1x1x64xf32> to vector<64xf32>
    %83 = vector.shape_cast %82 : vector<64xf32> to vector<1x1x64xf32>
    %84 = vector.broadcast %83 : vector<1x1x64xf32> to vector<8x16x64xf32>
    %85 = arith.mulf %80, %84 : vector<8x16x64xf32>
    %86 = arith.addf %77, %85 : vector<8x16x64xf32>
    %c0_50 = arith.constant 0 : index
    %c0_51 = arith.constant 0 : index
    %c0_52 = arith.constant 0 : index
    %87 = vector.load %arg5[%c0_50, %c0_51, %c0_52] : memref<1x1x64xf32, #tpu.memory_space<vmem>>, vector<1x1x64xf32>
    %88 = vector.broadcast %87 : vector<1x1x64xf32> to vector<8x16x64xf32>
    %89 = arith.addf %86, %88 : vector<8x16x64xf32>
    %cst_53 = arith.constant 0.000000e+00 : f32
    %90 = vector.broadcast %cst_53 : f32 to vector<8x16x64xf32>
    %91 = arith.cmpf ogt, %89, %90 : vector<8x16x64xf32>
    %c0_54 = arith.constant 0 : index
    %c0_55 = arith.constant 0 : index
    %c0_56 = arith.constant 0 : index
    %92 = vector.load %arg6[%c0_54, %c0_55, %c0_56] : memref<1x1x64xf32, #tpu.memory_space<vmem>>, vector<1x1x64xf32>
    %93 = vector.broadcast %92 : vector<1x1x64xf32> to vector<8x16x64xf32>
    %94 = arith.mulf %89, %93 : vector<8x16x64xf32>
    %95 = arith.select %91, %89, %94 : vector<8x16x64xi1>, vector<8x16x64xf32>
    %96 = arith.truncf %95 : vector<8x16x64xf32> to vector<8x16x64xbf16>
    %c0_57 = arith.constant 0 : index
    %c0_58 = arith.constant 0 : index
    %c0_59 = arith.constant 0 : index
    %c0_60 = arith.constant 0 : index
    %97 = vector.load %arg7[%c0_57, %c0_58, %c0_59, %c0_60] : memref<1x8x16x64xbf16, #tpu.memory_space<vmem>>, vector<1x8x16x64xbf16>
    %98 = vector.shape_cast %97 : vector<1x8x16x64xbf16> to vector<8x16x64xbf16>
    %99 = vector.shape_cast %96 : vector<8x16x64xbf16> to vector<1x8x16x64xbf16>
    tpu.vector_store %arg7[%c0_57, %c0_58, %c0_59, %c0_60], %99 {strides = array<i32>} : memref<1x8x16x64xbf16, #tpu.memory_space<vmem>>, vector<1x8x16x64xbf16>,
    return
  }
  func.func @transform_0(%arg0: i32, %arg1: i32, %arg2: i32) -> (i32, i32, i32, i32) {
    %c0_i32 = arith.constant 0 : i32
    %c0_i32_0 = arith.constant 0 : i32
    %c0_i32_1 = arith.constant 0 : i32
    return %arg0, %c0_i32, %c0_i32_0, %arg1 : i32, i32, i32, i32
  }
  func.func @transform_1(%arg0: i32, %arg1: i32, %arg2: i32) -> (i32, i32, i32) {
    %c0_i32 = arith.constant 0 : i32
    %c0_i32_0 = arith.constant 0 : i32
    %c0_i32_1 = arith.constant 0 : i32
    return %c0_i32, %c0_i32_0, %arg1 : i32, i32, i32
  }
  func.func @transform_2(%arg0: i32, %arg1: i32, %arg2: i32) -> (i32, i32, i32) {
    %c0_i32 = arith.constant 0 : i32
    %c0_i32_0 = arith.constant 0 : i32
    %c0_i32_1 = arith.constant 0 : i32
    return %c0_i32, %c0_i32_0, %arg1 : i32, i32, i32
  }
  func.func @transform_3(%arg0: i32, %arg1: i32, %arg2: i32) -> (i32, i32, i32) {
    %c0_i32 = arith.constant 0 : i32
    %c0_i32_0 = arith.constant 0 : i32
    %c0_i32_1 = arith.constant 0 : i32
    return %c0_i32, %c0_i32_0, %arg1 : i32, i32, i32
  }
  func.func @transform_4(%arg0: i32, %arg1: i32, %arg2: i32) -> (i32, i32, i32, i32) {
    %c0_i32 = arith.constant 0 : i32
    %c0_i32_0 = arith.constant 0 : i32
    return %arg0, %arg2, %c0_i32, %arg1 : i32, i32, i32, i32
  }
}

</mosaic_0001>

<llo_original>
// kernel: bottleneck_forward.5
$region0: #{bottleneck_forward.5}
  #allocation0 [shape = 'u32[]', space=smem, size = 0x4, offset = 0x4, fixed_abs, tag = 'smem constant byte address 0x4 - core index']
  #allocation1 [shape = 'u32[144,128]{1,0:T(1,128)}', space=vmem, size = 0x12000, scoped, tag = 'internal scratch']
  %s0 = inlined_call_operand.vmem [shape: bf16[512,64], index: 0, kind: input, shape index: {}]
  %s1 = inlined_call_operand.vmem [shape: bf16[64,32], index: 1, kind: input, shape index: {}]
  %s2 = inlined_call_operand.vmem [shape: f32[1,32], index: 2, kind: input, shape index: {}]
  %s3 = inlined_call_operand.vmem [shape: f32[512,32], index: 3, kind: input, shape index: {}]
  %s4 = inlined_call_operand.hbm [shape: f32[512,32], index: 4, kind: output, shape index: {}]
  %s5 = sld [smem:[#allocation0]]
  $region49: #{bottleneck_forward.5} parent=0
    _
  %s7 = ssub.s32 1, %s5
  %s8 = scalar_select 0, %s7, %s5
  $region1: #{bottleneck_forward.5} parent=0
    #allocation2 [shape = 'u8[131072]{0}', space=vmem, size = 0x20000, scoped, tag = 'output window, operand 0']
    #allocation3 [shape = 's32[2]{0}', space=sflag, size = 0x8, scoped, tag = 'scoped memory for bottleneck_forward.5']
    %9 = vsyncpa [#allocation3], 0
    %s10 = scalar_lea.sflag [#allocation3], 1
    %11 = vsyncpa %s10, 0
    loop: start=0, step=1, limit=6
    $region2: #{bottleneck_forward.5} parent=1 // loop_pre_header
      _
    $region3: #{bottleneck_forward.5} parent=1 // loop_header
      %s13 = sphi 0, %s17
      %p14 = scmp.ge.s32.totalorder %s13, 6
      %s20 = sphi 0, %s32
      %s21 = sphi 0, %s28
      %s22 = sphi 0, %s20
      %s23 = sphi 0, %s21
      %s24 = sphi 0, %s22
      %s25 = sphi 0, %s23
      %s35 = sphi 0, %s37
      %s38 = sphi 0, %s35
      %s39 = sphi 0, %s38
      %s55 = sphi 0, %s39
      %s61 = sphi 0, %s63
      %s64 = sphi 0, %s61
      %s65 = sphi 0, %s64
      %s81 = sphi 0, %s65
      %s87 = sphi 0, %s89
      %s90 = sphi 0, %s87
      %s91 = sphi 0, %s90
      %s107 = sphi 0, %s91
      %s115 = sphi 0, %s117
      %s118 = sphi 0, %s115
      %s119 = sphi 0, %s118
      %s135 = sphi 0, %s119
      %s143 = sphi 0, %s145
      %s146 = sphi 0, %s143
      %s147 = sphi 0, %s146
      %s163 = sphi 0, %s147
    $region4: #{bottleneck_forward.5} parent=1 // loop_header_branch
      %16 = sbr.rel (%p14) target = $region8
    $region5: #{bottleneck_forward.5} parent=1 // loop_body
      %s18 = ssub.s32 %s13, 1
      %s19 = ssub.s32 %s13, 2
      %s26 = sadd.s32 1, %s21
      %p27 = scmp.ge.s32.totalorder %s26, 1
      %s28 = scalar_select %p27, 0, %s26
      %s29 = sadd.s32 1, %s20
      %s30 = scalar_select %p27, %s29, %s20
      %p31 = scmp.ge.s32.totalorder %s30, 4
      %s32 = scalar_select %p31, 0, %s30
      %s33 = ssub.s32 %s20, %s32
      %p34 = scmp.eq.s32.totalorder %s33, 0
      %s36 = sadd.s32 %s35, 1
      %s37 = scalar_select %p34, %s35, %s36
      %p40 = pneg %p34
      %p41 = scmp.eq.s32.totalorder %s13, 3
      %p42 = por %p40, %p41
      %p43 = scmp.ne.s32.totalorder %s35, %s38
      %p44 = scmp.eq.s32.totalorder %s13, 0
      %p45 = por %p43, %p44
      %p46 = scmp.ne.s32.totalorder %s35, %s38
      %p47 = scmp.eq.s32.totalorder %s18, 3
      %p48 = por %p46, %p47
      %p49 = scmp.ne.s32.totalorder %s38, %s39
      %p50 = scmp.eq.s32.totalorder %s18, 0
      %p51 = por %p49, %p50
      %p52 = scmp.ne.s32.totalorder %s38, %s39
      %p53 = scmp.eq.s32.totalorder %s19, 3
      %p54 = por %p52, %p53
      %p56 = scmp.ne.s32.totalorder %s39, %s55
      %p57 = scmp.eq.s32.totalorder %s19, 0
      %p58 = por %p56, %p57
      %s59 = ssub.s32 %s21, %s28
      %p60 = scmp.eq.s32.totalorder %s59, 0
      %s62 = sadd.s32 %s61, 1
      %s63 = scalar_select %p60, %s61, %s62
      %p66 = pneg %p60
      %p67 = scmp.eq.s32.totalorder %s13, 3
      %p68 = por %p66, %p67
      %p69 = scmp.ne.s32.totalorder %s61, %s64
      %p70 = scmp.eq.s32.totalorder %s13, 0
      %p71 = por %p69, %p70
      %p72 = scmp.ne.s32.totalorder %s61, %s64
      %p73 = scmp.eq.s32.totalorder %s18, 3
      %p74 = por %p72, %p73
      %p75 = scmp.ne.s32.totalorder %s64, %s65
      %p76 = scmp.eq.s32.totalorder %s18, 0
      %p77 = por %p75, %p76
      %p78 = scmp.ne.s32.totalorder %s64, %s65
      %p79 = scmp.eq.s32.totalorder %s19, 3
      %p80 = por %p78, %p79
      %p82 = scmp.ne.s32.totalorder %s65, %s81
      %p83 = scmp.eq.s32.totalorder %s19, 0
      %p84 = por %p82, %p83
      %s85 = ssub.s32 %s21, %s28
      %p86 = scmp.eq.s32.totalorder %s85, 0
      %s88 = sadd.s32 %s87, 1
      %s89 = scalar_select %p86, %s87, %s88
      %p92 = pneg %p86
      %p93 = scmp.eq.s32.totalorder %s13, 3
      %p94 = por %p92, %p93
      %p95 = scmp.ne.s32.totalorder %s87, %s90
      %p96 = scmp.eq.s32.totalorder %s13, 0
      %p97 = por %p95, %p96
      %p98 = scmp.ne.s32.totalorder %s87, %s90
      %p99 = scmp.eq.s32.totalorder %s18, 3
      %p100 = por %p98, %p99
      %p101 = scmp.ne.s32.totalorder %s90, %s91
      %p102 = scmp.eq.s32.totalorder %s18, 0
      %p103 = por %p101, %p102
      %p104 = scmp.ne.s32.totalorder %s90, %s91
      %p105 = scmp.eq.s32.totalorder %s19, 3
      %p106 = por %p104, %p105
      %p108 = scmp.ne.s32.totalorder %s91, %s107
      %p109 = scmp.eq.s32.totalorder %s19, 0
      %p110 = por %p108, %p109
      %s111 = ssub.s32 %s20, %s32
      %s112 = ssub.s32 %s21, %s28
      %s113 = sor.u32 %s111, %s112
      %p114 = scmp.eq.s32.totalorder %s113, 0
      %s116 = sadd.s32 %s115, 1
      %s117 = scalar_select %p114, %s115, %s116
      %p120 = pneg %p114
      %p121 = scmp.eq.s32.totalorder %s13, 3
      %p122 = por %p120, %p121
      %p123 = scmp.ne.s32.totalorder %s115, %s118
      %p124 = scmp.eq.s32.totalorder %s13, 0
      %p125 = por %p123, %p124
      %p126 = scmp.ne.s32.totalorder %s115, %s118
      %p127 = scmp.eq.s32.totalorder %s18, 3
      %p128 = por %p126, %p127
      %p129 = scmp.ne.s32.totalorder %s118, %s119
      %p130 = scmp.eq.s32.totalorder %s18, 0
      %p131 = por %p129, %p130
      %p132 = scmp.ne.s32.totalorder %s118, %s119
      %p133 = scmp.eq.s32.totalorder %s19, 3
      %p134 = por %p132, %p133
      %p136 = scmp.ne.s32.totalorder %s119, %s135
      %p137 = scmp.eq.s32.totalorder %s19, 0
      %p138 = por %p136, %p137
      %s139 = ssub.s32 %s20, %s32
      %s140 = ssub.s32 %s21, %s28
      %s141 = sor.u32 %s139, %s140
      %p142 = scmp.eq.s32.totalorder %s141, 0
      %s144 = sadd.s32 %s143, 1
      %s145 = scalar_select %p142, %s143, %s144
      %p148 = pneg %p142
      %p149 = scmp.eq.s32.totalorder %s13, 3
      %p150 = por %p148, %p149
      %p151 = scmp.ne.s32.totalorder %s143, %s146
      %p152 = scmp.eq.s32.totalorder %s13, 0
      %p153 = por %p151, %p152
      %p154 = scmp.ne.s32.totalorder %s143, %s146
      %p155 = scmp.eq.s32.totalorder %s18, 3
      %p156 = por %p154, %p155
      %p157 = scmp.ne.s32.totalorder %s146, %s147
      %p158 = scmp.eq.s32.totalorder %s18, 0
      %p159 = por %p157, %p158
      %p160 = scmp.ne.s32.totalorder %s146, %s147
      %p161 = scmp.eq.s32.totalorder %s19, 3
      %p162 = por %p160, %p161
      %p164 = scmp.ne.s32.totalorder %s147, %s163
      %p165 = scmp.eq.s32.totalorder %s19, 0
      %p166 = por %p164, %p165
      %p167 = scmp.le.s32.totalorder 1, %s13
      %p168 = scmp.lt.s32.totalorder %s13, 5
      %p169 = pnand %p167, %p168
      %p170 = pneg %p169
      // Predicated region
      $region9: #{bottleneck_forward.5} parent=5 // pred_check
        _
      $region10: #{bottleneck_forward.5} parent=5 // pred_check_branch
        %172 = sbr.rel (%p169) target = $region12
      $region11: #{bottleneck_forward.5} parent=5 // pred_region
        %s173 = ssub.s32 %s13, 1
        // Predicated region
        $region13: #{bottleneck_forward.5} parent=11 // pred_check
          %p174 = pneg %p77
        $region14: #{bottleneck_forward.5} parent=11 // pred_check_branch
          %176 = sbr.rel (%p174) target = $region16
        $region15: #{bottleneck_forward.5} parent=11 // pred_region
          %p177 = scmp.lt.s32.totalorder %s23, 0
          %s178 = scalar_select %p177, %s23, 0
          %s179 = smul.addr %s178, 4
          %s180 = scalar_lea.vmem %s1, %s179
        $region16: #{bottleneck_forward.5} parent=11 // pred_fallthru
          _
        // Predicated region
        $region17: #{bottleneck_forward.5} parent=11 // pred_check
          %p181 = pneg %p103
        $region18: #{bottleneck_forward.5} parent=11 // pred_check_branch
          %183 = sbr.rel (%p181) target = $region20
        $region19: #{bottleneck_forward.5} parent=11 // pred_region
          %p184 = scmp.lt.s32.totalorder %s23, 0
          %s185 = scalar_select %p184, %s23, 0
          %s186 = scalar_lea.vmem %s2, %s185
        $region20: #{bottleneck_forward.5} parent=11 // pred_fallthru
          _
      $region12: #{bottleneck_forward.5} parent=5 // pred_fallthru
        _
      %p187 = scmp.lt.s32.totalorder %s13, 4
      // Predicated region
      $region21: #{bottleneck_forward.5} parent=5 // pred_check
        %p188 = pneg %p187
      $region22: #{bottleneck_forward.5} parent=5 // pred_check_branch
        %190 = sbr.rel (%p188) target = $region24
      $region23: #{bottleneck_forward.5} parent=5 // pred_region
        // Predicated region
        $region25: #{bottleneck_forward.5} parent=23 // pred_check
          %p191 = pneg %p45
        $region26: #{bottleneck_forward.5} parent=23 // pred_check_branch
          %193 = sbr.rel (%p191) target = $region28
        $region27: #{bottleneck_forward.5} parent=23 // pred_region
          %s194 = smul.u32 16, %s20
          %p195 = scmp.lt.s32.totalorder %s194, 63
          %s196 = scalar_select %p195, %s194, 63
          %s197 = smul.addr %s196, 4
          %s198 = scalar_lea.vmem %s0, %s197
          %s199 = smul.u32 16, %s20
        $region28: #{bottleneck_forward.5} parent=23 // pred_fallthru
          _
        // Predicated region
        $region29: #{bottleneck_forward.5} parent=23 // pred_check
          %p200 = pneg %p125
        $region30: #{bottleneck_forward.5} parent=23 // pred_check_branch
          %202 = sbr.rel (%p200) target = $region32
        $region31: #{bottleneck_forward.5} parent=23 // pred_region
          %s203 = smul.u32 16, %s20
          %p204 = scmp.lt.s32.totalorder %s203, 63
          %s205 = scalar_select %p204, %s203, 63
          %p206 = scmp.lt.s32.totalorder %s21, 0
          %s207 = scalar_select %p206, %s21, 0
          %s208 = sadd.s32 %s207, %s205
          %s209 = smul.addr %s208, 8
          %s210 = scalar_lea.vmem %s3, %s209
          %s211 = smul.u32 16, %s20
        $region32: #{bottleneck_forward.5} parent=23 // pred_fallthru
          _
      $region24: #{bottleneck_forward.5} parent=5 // pred_fallthru
        _
      %p212 = scmp.le.s32.totalorder 1, %s13
      %p213 = scmp.lt.s32.totalorder %s13, 5
      %p214 = pnand %p212, %p213
      %p215 = pneg %p214
      // Predicated region
      $region33: #{bottleneck_forward.5} parent=5 // pred_check
        _
      $region34: #{bottleneck_forward.5} parent=5 // pred_check_branch
        %217 = sbr.rel (%p214) target = $region36
      $region35: #{bottleneck_forward.5} parent=5 // pred_region
        %s218 = ssub.s32 %s13, 1
        %s219 = smul.u32 16, %s22
        %p220 = scmp.lt.s32.totalorder %s219, 63
        %s221 = scalar_select %p220, %s219, 63
        %s222 = smul.addr %s221, 4
        %s223 = scalar_lea.vmem %s0, %s222
        %p224 = pneg %p51
        %p225 = pneg %p48
        %p226 = scmp.lt.s32.totalorder %s23, 0
        %s227 = scalar_select %p226, %s23, 0
        %s228 = smul.addr %s227, 4
        %s229 = scalar_lea.vmem %s1, %s228
        %p230 = pneg %p77
        %p231 = pneg %p74
        %p232 = scmp.lt.s32.totalorder %s23, 0
        %s233 = scalar_select %p232, %s23, 0
        %s234 = scalar_lea.vmem %s2, %s233
        %p235 = pneg %p103
        %p236 = pneg %p100
        %s237 = smul.u32 16, %s22
        %p238 = scmp.lt.s32.totalorder %s237, 63
        %s239 = scalar_select %p238, %s237, 63
        %p240 = scmp.lt.s32.totalorder %s23, 0
        %s241 = scalar_select %p240, %s23, 0
        %s242 = sadd.s32 %s241, %s239
        %s243 = smul.addr %s242, 8
        %s244 = scalar_lea.vmem %s3, %s243
        %p245 = pneg %p131
        %p246 = pneg %p128
        %p247 = pneg %p159
        %p248 = pneg %p156
        %s249 = sand.u32 %s146, 1
        %s250 = scalar_lea.sflag [#allocation3], %s249
        %s251 = sand.u32 %s146, 1
        %s252 = smul.addr %s251, 128
        %s253 = scalar_lea.vmem [#allocation2], %s252
        %s254 = smul.u32 16, %s22
        %p255 = scmp.lt.s32.totalorder %s254, 63
        %s256 = scalar_select %p255, %s254, 63
        %s257 = smul.addr %s256, 4
        %s258 = scalar_lea.vmem %s0, %s257
        %s259 = smul.u32 16, %s22
        %p260 = scmp.lt.s32.totalorder %s23, 0
        %s261 = scalar_select %p260, %s23, 0
        %s262 = smul.addr %s261, 4
        %s263 = scalar_lea.vmem %s1, %s262
        %p264 = scmp.lt.s32.totalorder %s23, 0
        %s265 = scalar_select %p264, %s23, 0
        %s266 = scalar_lea.vmem %s2, %s265
        %s267 = smul.u32 16, %s22
        %p268 = scmp.lt.s32.totalorder %s267, 63
        %s269 = scalar_select %p268, %s267, 63
        %p270 = scmp.lt.s32.totalorder %s23, 0
        %s271 = scalar_select %p270, %s23, 0
        %s272 = sadd.s32 %s271, %s269
        %s273 = smul.addr %s272, 8
        %s274 = scalar_lea.vmem %s3, %s273
        %s275 = smul.u32 16, %s22
        %s276 = smul.u32 16, %s22
        %v278 = vld [vmem:[%s258] sm:$0xf]
        %v279 = vld [vmem:[%s258 + $0x4] sm:$0xf]
        %v280 = vld [vmem:[%s258 + $0x8] sm:$0xf]
        %v281 = vld [vmem:[%s258 + $0xc] sm:$0xf]
        %v282 = vld [vmem:[%s258 + $0x10] sm:$0xf]
        %v283 = vld [vmem:[%s258 + $0x14] sm:$0xf]
        %v284 = vld [vmem:[%s258 + $0x18] sm:$0xf]
        %v285 = vld [vmem:[%s258 + $0x1c] sm:$0xf]
        %v286 = vld [vmem:[%s258 + $0x20] sm:$0xf]
        %v287 = vld [vmem:[%s258 + $0x24] sm:$0xf]
        %v288 = vld [vmem:[%s258 + $0x28] sm:$0xf]
        %v289 = vld [vmem:[%s258 + $0x2c] sm:$0xf]
        %v290 = vld [vmem:[%s258 + $0x30] sm:$0xf]
        %v291 = vld [vmem:[%s258 + $0x34] sm:$0xf]
        %v292 = vld [vmem:[%s258 + $0x38] sm:$0xf]
        %v293 = vld [vmem:[%s258 + $0x3c] sm:$0xf]
        %v294 = vld [vmem:[%s263] sm:$0xf]
        %v295 = vld [vmem:[%s263 + $0x4] sm:$0xf]
        %v296 = vld [vmem:[%s263 + $0x8] sm:$0xf]
        %v297 = vld [vmem:[%s263 + $0xc] sm:$0xf]
        %v298 = vld [vmem:[%s263 + $0x10] sm:$0xf]
        %v299 = vld [vmem:[%s263 + $0x14] sm:$0xf]
        %v300 = vld [vmem:[%s263 + $0x18] sm:$0xf]
        %v301 = vld [vmem:[%s263 + $0x1c] sm:$0xf]
        %v302 = vld [vmem:[%s266] sm:$0x1]
        %v304 = vlaneseq
        %v305 = vshrl.u32 %v304, 7
        %v306 = vsub.s32 0, %v305
        %v307 = vrot.slane %v302, %v306
        %v325 = vunpack.c.l.b16 %v278
        %v326 = vunpack.c.l.b16 %v279
        %v327 = vunpack.c.l.b16 %v280
        %v328 = vunpack.c.l.b16 %v281
        %v329 = vunpack.c.l.b16 %v282
        %v330 = vunpack.c.l.b16 %v283
        %v331 = vunpack.c.l.b16 %v284
        %v332 = vunpack.c.l.b16 %v285
        %v333 = vunpack.c.l.b16 %v286
        %v334 = vunpack.c.l.b16 %v287
        %v335 = vunpack.c.l.b16 %v288
        %v336 = vunpack.c.l.b16 %v289
        %v337 = vunpack.c.l.b16 %v290
        %v338 = vunpack.c.l.b16 %v291
        %v339 = vunpack.c.l.b16 %v292
        %v340 = vunpack.c.l.b16 %v293
        %v341 = vpack.c.b16 %v326, %v325
        %v342 = vpack.c.b16 %v328, %v327
        %v343 = vpack.c.b16 %v330, %v329
        %v344 = vpack.c.b16 %v332, %v331
        %v345 = vpack.c.b16 %v334, %v333
        %v346 = vpack.c.b16 %v336, %v335
        %v347 = vpack.c.b16 %v338, %v337
        %v348 = vpack.c.b16 %v340, %v339
        %v357 = vunpack.c.l.b16 %v294
        %v358 = vunpack.c.l.b16 %v295
        %v359 = vunpack.c.l.b16 %v296
        %v360 = vunpack.c.l.b16 %v297
        %v361 = vunpack.c.l.b16 %v298
        %v362 = vunpack.c.l.b16 %v299
        %v363 = vunpack.c.l.b16 %v300
        %v364 = vunpack.c.l.b16 %v301
        %v365 = vpack.c.b16 %v358, %v357
        %v366 = vpack.c.b16 %v360, %v359
        %v367 = vpack.c.b16 %v362, %v361
        %v368 = vpack.c.b16 %v364, %v363
        %vm373 = vcmask 523264
        %v375 = vsel %vm373, %v341, 0
        %v378 = vsel %vm373, %v342, 0
        %v381 = vsel %vm373, %v343, 0
        %v384 = vsel %vm373, %v344, 0
        %v387 = vsel %vm373, %v345, 0
        %v390 = vsel %vm373, %v346, 0
        %v393 = vsel %vm373, %v347, 0
        %v396 = vsel %vm373, %v348, 0
        %398 = vmatprep.subr.bf16.mxu0 0
        %399 = vmatpush1.bf16.msra.mxu0 %v365
        %400 = vmatprep.subr.bf16.mxu0 0
        %401 = vmatpush1.bf16.msra.mxu0 %v366
        %402 = vmatprep.subr.bf16.mxu0 0
        %403 = vmatpush1.bf16.msra.mxu0 %v367
        %404 = vmatprep.subr.bf16.mxu0 0
        %405 = vmatpush1.bf16.msra.mxu0 %v368
        %406 = vmatprep.subr.bf16.mxu0 0
        %407 = vmatpush1.bf16.msra.mxu0 0
        %408 = vmatprep.subr.bf16.mxu0 0
        %409 = vmatpush1.bf16.msra.mxu0 0
        %410 = vmatprep.subr.bf16.mxu0 0
        %411 = vmatpush1.bf16.msra.mxu0 0
        %412 = vmatprep.subr.bf16.mxu0 0
        %413 = vmatpush1.bf16.msra.mxu0 0
        %414 = vmatprep.subr.bf16.mxu0 0
        %415 = vmatpush1.bf16.msra.mxu0 0
        %416 = vmatprep.subr.bf16.mxu0 0
        %417 = vmatpush1.bf16.msra.mxu0 0
        %418 = vmatprep.subr.bf16.mxu0 0
        %419 = vmatpush1.bf16.msra.mxu0 0
        %420 = vmatprep.subr.bf16.mxu0 0
        %421 = vmatpush1.bf16.msra.mxu0 0
        %422 = vmatprep.subr.bf16.mxu0 0
        %423 = vmatpush1.bf16.msra.mxu0 0
        %424 = vmatprep.subr.bf16.mxu0 0
        %425 = vmatpush1.bf16.msra.mxu0 0
        %426 = vmatprep.subr.bf16.mxu0 0
        %427 = vmatpush1.bf16.msra.mxu0 0
        %428 = vmatprep.subr.bf16.mxu0 0
        %429 = vmatpush1.bf16.msra.mxu0 0
        %430 = vmatprep.mubr.bf16.mxu0 0
        %431 = vmatmul.mubr.bf16.gmra.mrb[0].mxu0 %v375
        %v432 = vpop.f32.mrb[0].mxu0
        %v433 = vadd.f32 %v307, %v432
        %v434 = vpop.f32.mrb[0].mxu0
        %v435 = vpop.f32.mrb[0].mxu0
        %v436 = vadd.f32 %v307, %v435
        %v437 = vpop.f32.mrb[0].mxu0
        %438 = vmatprep.mubr.bf16.mxu0 0
        %439 = vmatmul.mubr.bf16.gmra.mrb[0].mxu0 %v378
        %v440 = vpop.f32.mrb[0].mxu0
        %v441 = vadd.f32 %v307, %v440
        %v442 = vpop.f32.mrb[0].mxu0
        %v443 = vpop.f32.mrb[0].mxu0
        %v444 = vadd.f32 %v307, %v443
        %v445 = vpop.f32.mrb[0].mxu0
        %446 = vmatprep.mubr.bf16.mxu0 0
        %447 = vmatmul.mubr.bf16.gmra.mrb[0].mxu0 %v381
        %v448 = vpop.f32.mrb[0].mxu0
        %v449 = vadd.f32 %v307, %v448
        %v450 = vpop.f32.mrb[0].mxu0
        %v451 = vpop.f32.mrb[0].mxu0
        %v452 = vadd.f32 %v307, %v451
        %v453 = vpop.f32.mrb[0].mxu0
        %454 = vmatprep.mubr.bf16.mxu0 0
        %455 = vmatmul.mubr.bf16.gmra.mrb[0].mxu0 %v384
        %v456 = vpop.f32.mrb[0].mxu0
        %v457 = vadd.f32 %v307, %v456
        %v458 = vpop.f32.mrb[0].mxu0
        %v459 = vpop.f32.mrb[0].mxu0
        %v460 = vadd.f32 %v307, %v459
        %v461 = vpop.f32.mrb[0].mxu0
        %462 = vmatprep.mubr.bf16.mxu0 0
        %463 = vmatmul.mubr.bf16.gmra.mrb[0].mxu0 %v387
        %v464 = vpop.f32.mrb[0].mxu0
        %v465 = vadd.f32 %v307, %v464
        %v466 = vpop.f32.mrb[0].mxu0
        %v467 = vpop.f32.mrb[0].mxu0
        %v468 = vadd.f32 %v307, %v467
        %v469 = vpop.f32.mrb[0].mxu0
        %470 = vmatprep.mubr.bf16.mxu0 0
        %471 = vmatmul.mubr.bf16.gmra.mrb[0].mxu0 %v390
        %v472 = vpop.f32.mrb[0].mxu0
        %v473 = vadd.f32 %v307, %v472
        %v474 = vpop.f32.mrb[0].mxu0
        %v475 = vpop.f32.mrb[0].mxu0
        %v476 = vadd.f32 %v307, %v475
        %v477 = vpop.f32.mrb[0].mxu0
        %478 = vmatprep.mubr.bf16.mxu0 0
        %479 = vmatmul.mubr.bf16.gmra.mrb[0].mxu0 %v393
        %v480 = vpop.f32.mrb[0].mxu0
        %v481 = vadd.f32 %v307, %v480
        %v482 = vpop.f32.mrb[0].mxu0
        %v483 = vpop.f32.mrb[0].mxu0
        %v484 = vadd.f32 %v307, %v483
        %v485 = vpop.f32.mrb[0].mxu0
        %486 = vmatprep.mubr.bf16.mxu0 0
        %487 = vmatmul.mubr.bf16.gmra.mrb[0].mxu0 %v396
        %v488 = vpop.f32.mrb[0].mxu0
        %v489 = vadd.f32 %v307, %v488
        %v490 = vpop.f32.mrb[0].mxu0
        %v491 = vpop.f32.mrb[0].mxu0
        %v492 = vadd.f32 %v307, %v491
        %v493 = vpop.f32.mrb[0].mxu0
        %494 = vdwg.mxu0
        %v495 = vld [vmem:[%s274] sm:$0xff]
        %v496 = vld [vmem:[%s274 + $0x8] sm:$0xff]
        %v497 = vld [vmem:[%s274 + $0x10] sm:$0xff]
        %v498 = vld [vmem:[%s274 + $0x18] sm:$0xff]
        %v499 = vld [vmem:[%s274 + $0x20] sm:$0xff]
        %v500 = vld [vmem:[%s274 + $0x28] sm:$0xff]
        %v501 = vld [vmem:[%s274 + $0x30] sm:$0xff]
        %v502 = vld [vmem:[%s274 + $0x38] sm:$0xff]
        %v503 = vld [vmem:[%s274 + $0x40] sm:$0xff]
        %v504 = vld [vmem:[%s274 + $0x48] sm:$0xff]
        %v505 = vld [vmem:[%s274 + $0x50] sm:$0xff]
        %v506 = vld [vmem:[%s274 + $0x58] sm:$0xff]
        %v507 = vld [vmem:[%s274 + $0x60] sm:$0xff]
        %v508 = vld [vmem:[%s274 + $0x68] sm:$0xff]
        %v509 = vld [vmem:[%s274 + $0x70] sm:$0xff]
        %v510 = vld [vmem:[%s274 + $0x78] sm:$0xff]
        %v511 = vadd.f32 %v433, %v495
        %v512 = vadd.f32 %v436, %v496
        %v513 = vadd.f32 %v441, %v497
        %v514 = vadd.f32 %v444, %v498
        %v515 = vadd.f32 %v449, %v499
        %v516 = vadd.f32 %v452, %v500
        %v517 = vadd.f32 %v457, %v501
        %v518 = vadd.f32 %v460, %v502
        %v519 = vadd.f32 %v465, %v503
        %v520 = vadd.f32 %v468, %v504
        %v521 = vadd.f32 %v473, %v505
        %v522 = vadd.f32 %v476, %v506
        %v523 = vadd.f32 %v481, %v507
        %v524 = vadd.f32 %v484, %v508
        %v525 = vadd.f32 %v489, %v509
        %v526 = vadd.f32 %v492, %v510
        %vm527 = vcmask 261120
        %528 = vst.msk [vmem:[%s253] sm:$0xff] %vm527, %v511
        %529 = vst.msk [vmem:[%s253 + $0x8] sm:$0xff] %vm527, %v512
        %530 = vst.msk [vmem:[%s253 + $0x10] sm:$0xff] %vm527, %v513
        %531 = vst.msk [vmem:[%s253 + $0x18] sm:$0xff] %vm527, %v514
        %532 = vst.msk [vmem:[%s253 + $0x20] sm:$0xff] %vm527, %v515
        %533 = vst.msk [vmem:[%s253 + $0x28] sm:$0xff] %vm527, %v516
        %534 = vst.msk [vmem:[%s253 + $0x30] sm:$0xff] %vm527, %v517
        %535 = vst.msk [vmem:[%s253 + $0x38] sm:$0xff] %vm527, %v518
        %536 = vst.msk [vmem:[%s253 + $0x40] sm:$0xff] %vm527, %v519
        %537 = vst.msk [vmem:[%s253 + $0x48] sm:$0xff] %vm527, %v520
        %538 = vst.msk [vmem:[%s253 + $0x50] sm:$0xff] %vm527, %v521
        %539 = vst.msk [vmem:[%s253 + $0x58] sm:$0xff] %vm527, %v522
        %540 = vst.msk [vmem:[%s253 + $0x60] sm:$0xff] %vm527, %v523
        %541 = vst.msk [vmem:[%s253 + $0x68] sm:$0xff] %vm527, %v524
        %542 = vst.msk [vmem:[%s253 + $0x70] sm:$0xff] %vm527, %v525
        %543 = vst.msk [vmem:[%s253 + $0x78] sm:$0xff] %vm527, %v526
        %s544 = sand.u32 %s146, 1
        %s545 = scalar_lea.sflag [#allocation3], %s544
        %s546 = sand.u32 %s146, 1
        %s547 = smul.addr %s546, 128
        %s548 = scalar_lea.vmem [#allocation2], %s547
        // Predicated region
        $region37: #{bottleneck_forward.5} parent=35 // pred_check
          %p549 = pneg %p156
        $region38: #{bottleneck_forward.5} parent=35 // pred_check_branch
          %551 = sbr.rel (%p549) target = $region40
        $region39: #{bottleneck_forward.5} parent=35 // pred_region
          %s552 = smul.u32 16, %s22
          %s554 = ssub.s32 2048, 2048
          %555 = vsyncadd %s545, %s554
          %s556 = sadd.s32 %s23, %s552
          %s557 = smul.addr %s556, 128
          %s558 = scalar_lea.hbm %s4, %s557
          %s559 = sshll.u32 %s548, 4
          %s560 = int_to_ptr.vmem [resolvable:$true] %s559
          %565 = dma.vmem_to_hbm [thread:$0]  %s560, 2048, %s558, %s545, 128, 128, 8
        $region40: #{bottleneck_forward.5} parent=35 // pred_fallthru
          _
      $region36: #{bottleneck_forward.5} parent=5 // pred_fallthru
        _
      %p566 = scmp.le.s32.totalorder 2, %s13
      // Predicated region
      $region41: #{bottleneck_forward.5} parent=5 // pred_check
        %p567 = pneg %p566
      $region42: #{bottleneck_forward.5} parent=5 // pred_check_branch
        %569 = sbr.rel (%p567) target = $region44
      $region43: #{bottleneck_forward.5} parent=5 // pred_region
        %s570 = ssub.s32 %s13, 2
        // Predicated region
        $region45: #{bottleneck_forward.5} parent=43 // pred_check
          %p571 = pneg %p162
        $region46: #{bottleneck_forward.5} parent=43 // pred_check_branch
          %573 = sbr.rel (%p571) target = $region48
        $region47: #{bottleneck_forward.5} parent=43 // pred_region
          %s574 = sand.u32 %s147, 1
          %s575 = scalar_lea.sflag [#allocation3], %s574
          %s576 = sand.u32 %s147, 1
          %s577 = smul.addr %s576, 128
          %s578 = scalar_lea.vmem [#allocation2], %s577
          %579 = dma.done %s575, 2048
        $region48: #{bottleneck_forward.5} parent=43 // pred_fallthru
          _
      $region44: #{bottleneck_forward.5} parent=5 // pred_fallthru
        _
    $region6: #{bottleneck_forward.5} parent=1 // loop_footer
      %s17 = sadd.s32 1, %s13
    $region7: #{bottleneck_forward.5} parent=1 // loop_footer_branch
      %12 = sbr.rel target = $region3
    $region8: #{bottleneck_forward.5} parent=1 // loop_exit
      _
    %580 = vsyncpa [#allocation3], 1
    %s581 = scalar_lea.sflag [#allocation3], 1
    %582 = vsyncpa %s581, 1

// kernel: bottleneck_forward.3
$region0: #{bottleneck_forward.3}
  #allocation0 [shape = 'u32[]', space=smem, size = 0x4, offset = 0x4, fixed_abs, tag = 'smem constant byte address 0x4 - core index']
  #allocation1 [shape = 'u32[144,128]{1,0:T(1,128)}', space=vmem, size = 0x12000, scoped, tag = 'internal scratch']
  %s0 = inlined_call_operand.vmem [shape: bf16[512,32], index: 0, kind: input, shape index: {}]
  %s1 = inlined_call_operand.vmem [shape: bf16[32,64], index: 1, kind: input, shape index: {}]
  %s2 = inlined_call_operand.vmem [shape: f32[1,64], index: 2, kind: input, shape index: {}]
  %s3 = inlined_call_operand.vmem [shape: f32[1,64], index: 3, kind: input, shape index: {}]
  %s4 = inlined_call_operand.vmem [shape: bf16[512,64], index: 4, kind: output, shape index: {}]
  %s5 = sld [smem:[#allocation0]]
  $region49: #{bottleneck_forward.3} parent=0
    _
  %s7 = ssub.s32 1, %s5
  %s8 = scalar_select 0, %s7, %s5
  loop: start=0, step=1, limit=6
  $region2: #{bottleneck_forward.3} parent=0 // loop_pre_header
    _
  $region3: #{bottleneck_forward.3} parent=0 // loop_header
    %s10 = sphi 0, %s14
    %p11 = scmp.ge.s32.totalorder %s10, 6
    %s17 = sphi 0, %s29
    %s18 = sphi 0, %s25
    %s19 = sphi 0, %s17
    %s20 = sphi 0, %s18
    %s21 = sphi 0, %s19
    %s22 = sphi 0, %s20
    %s32 = sphi 0, %s34
    %s35 = sphi 0, %s32
    %s36 = sphi 0, %s35
    %s52 = sphi 0, %s36
    %s58 = sphi 0, %s60
    %s61 = sphi 0, %s58
    %s62 = sphi 0, %s61
    %s78 = sphi 0, %s62
    %s84 = sphi 0, %s86
    %s87 = sphi 0, %s84
    %s88 = sphi 0, %s87
    %s104 = sphi 0, %s88
    %s110 = sphi 0, %s112
    %s113 = sphi 0, %s110
    %s114 = sphi 0, %s113
    %s130 = sphi 0, %s114
    %s138 = sphi 0, %s140
    %s141 = sphi 0, %s138
    %s142 = sphi 0, %s141
    %s158 = sphi 0, %s142
  $region4: #{bottleneck_forward.3} parent=0 // loop_header_branch
    %13 = sbr.rel (%p11) target = $region8
  $region5: #{bottleneck_forward.3} parent=0 // loop_body
    %s15 = ssub.s32 %s10, 1
    %s16 = ssub.s32 %s10, 2
    %s23 = sadd.s32 1, %s18
    %p24 = scmp.ge.s32.totalorder %s23, 1
    %s25 = scalar_select %p24, 0, %s23
    %s26 = sadd.s32 1, %s17
    %s27 = scalar_select %p24, %s26, %s17
    %p28 = scmp.ge.s32.totalorder %s27, 4
    %s29 = scalar_select %p28, 0, %s27
    %s30 = ssub.s32 %s17, %s29
    %p31 = scmp.eq.s32.totalorder %s30, 0
    %s33 = sadd.s32 %s32, 1
    %s34 = scalar_select %p31, %s32, %s33
    %p37 = pneg %p31
    %p38 = scmp.eq.s32.totalorder %s10, 3
    %p39 = por %p37, %p38
    %p40 = scmp.ne.s32.totalorder %s32, %s35
    %p41 = scmp.eq.s32.totalorder %s10, 0
    %p42 = por %p40, %p41
    %p43 = scmp.ne.s32.totalorder %s32, %s35
    %p44 = scmp.eq.s32.totalorder %s15, 3
    %p45 = por %p43, %p44
    %p46 = scmp.ne.s32.totalorder %s35, %s36
    %p47 = scmp.eq.s32.totalorder %s15, 0
    %p48 = por %p46, %p47
    %p49 = scmp.ne.s32.totalorder %s35, %s36
    %p50 = scmp.eq.s32.totalorder %s16, 3
    %p51 = por %p49, %p50
    %p53 = scmp.ne.s32.totalorder %s36, %s52
    %p54 = scmp.eq.s32.totalorder %s16, 0
    %p55 = por %p53, %p54
    %s56 = ssub.s32 %s18, %s25
    %p57 = scmp.eq.s32.totalorder %s56, 0
    %s59 = sadd.s32 %s58, 1
    %s60 = scalar_select %p57, %s58, %s59
    %p63 = pneg %p57
    %p64 = scmp.eq.s32.totalorder %s10, 3
    %p65 = por %p63, %p64
    %p66 = scmp.ne.s32.totalorder %s58, %s61
    %p67 = scmp.eq.s32.totalorder %s10, 0
    %p68 = por %p66, %p67
    %p69 = scmp.ne.s32.totalorder %s58, %s61
    %p70 = scmp.eq.s32.totalorder %s15, 3
    %p71 = por %p69, %p70
    %p72 = scmp.ne.s32.totalorder %s61, %s62
    %p73 = scmp.eq.s32.totalorder %s15, 0
    %p74 = por %p72, %p73
    %p75 = scmp.ne.s32.totalorder %s61, %s62
    %p76 = scmp.eq.s32.totalorder %s16, 3
    %p77 = por %p75, %p76
    %p79 = scmp.ne.s32.totalorder %s62, %s78
    %p80 = scmp.eq.s32.totalorder %s16, 0
    %p81 = por %p79, %p80
    %s82 = ssub.s32 %s18, %s25
    %p83 = scmp.eq.s32.totalorder %s82, 0
    %s85 = sadd.s32 %s84, 1
    %s86 = scalar_select %p83, %s84, %s85
    %p89 = pneg %p83
    %p90 = scmp.eq.s32.totalorder %s10, 3
    %p91 = por %p89, %p90
    %p92 = scmp.ne.s32.totalorder %s84, %s87
    %p93 = scmp.eq.s32.totalorder %s10, 0
    %p94 = por %p92, %p93
    %p95 = scmp.ne.s32.totalorder %s84, %s87
    %p96 = scmp.eq.s32.totalorder %s15, 3
    %p97 = por %p95, %p96
    %p98 = scmp.ne.s32.totalorder %s87, %s88
    %p99 = scmp.eq.s32.totalorder %s15, 0
    %p100 = por %p98, %p99
    %p101 = scmp.ne.s32.totalorder %s87, %s88
    %p102 = scmp.eq.s32.totalorder %s16, 3
    %p103 = por %p101, %p102
    %p105 = scmp.ne.s32.totalorder %s88, %s104
    %p106 = scmp.eq.s32.totalorder %s16, 0
    %p107 = por %p105, %p106
    %s108 = ssub.s32 %s18, %s25
    %p109 = scmp.eq.s32.totalorder %s108, 0
    %s111 = sadd.s32 %s110, 1
    %s112 = scalar_select %p109, %s110, %s111
    %p115 = pneg %p109
    %p116 = scmp.eq.s32.totalorder %s10, 3
    %p117 = por %p115, %p116
    %p118 = scmp.ne.s32.totalorder %s110, %s113
    %p119 = scmp.eq.s32.totalorder %s10, 0
    %p120 = por %p118, %p119
    %p121 = scmp.ne.s32.totalorder %s110, %s113
    %p122 = scmp.eq.s32.totalorder %s15, 3
    %p123 = por %p121, %p122
    %p124 = scmp.ne.s32.totalorder %s113, %s114
    %p125 = scmp.eq.s32.totalorder %s15, 0
    %p126 = por %p124, %p125
    %p127 = scmp.ne.s32.totalorder %s113, %s114
    %p128 = scmp.eq.s32.totalorder %s16, 3
    %p129 = por %p127, %p128
    %p131 = scmp.ne.s32.totalorder %s114, %s130
    %p132 = scmp.eq.s32.totalorder %s16, 0
    %p133 = por %p131, %p132
    %s134 = ssub.s32 %s17, %s29
    %s135 = ssub.s32 %s18, %s25
    %s136 = sor.u32 %s134, %s135
    %p137 = scmp.eq.s32.totalorder %s136, 0
    %s139 = sadd.s32 %s138, 1
    %s140 = scalar_select %p137, %s138, %s139
    %p143 = pneg %p137
    %p144 = scmp.eq.s32.totalorder %s10, 3
    %p145 = por %p143, %p144
    %p146 = scmp.ne.s32.totalorder %s138, %s141
    %p147 = scmp.eq.s32.totalorder %s10, 0
    %p148 = por %p146, %p147
    %p149 = scmp.ne.s32.totalorder %s138, %s141
    %p150 = scmp.eq.s32.totalorder %s15, 3
    %p151 = por %p149, %p150
    %p152 = scmp.ne.s32.totalorder %s141, %s142
    %p153 = scmp.eq.s32.totalorder %s15, 0
    %p154 = por %p152, %p153
    %p155 = scmp.ne.s32.totalorder %s141, %s142
    %p156 = scmp.eq.s32.totalorder %s16, 3
    %p157 = por %p155, %p156
    %p159 = scmp.ne.s32.totalorder %s142, %s158
    %p160 = scmp.eq.s32.totalorder %s16, 0
    %p161 = por %p159, %p160
    %p162 = scmp.le.s32.totalorder 1, %s10
    %p163 = scmp.lt.s32.totalorder %s10, 5
    %p164 = pnand %p162, %p163
    %p165 = pneg %p164
    // Predicated region
    $region9: #{bottleneck_forward.3} parent=5 // pred_check
      _
    $region10: #{bottleneck_forward.3} parent=5 // pred_check_branch
      %167 = sbr.rel (%p164) target = $region12
    $region11: #{bottleneck_forward.3} parent=5 // pred_region
      %s168 = ssub.s32 %s10, 1
      // Predicated region
      $region13: #{bottleneck_forward.3} parent=11 // pred_check
        %p169 = pneg %p74
      $region14: #{bottleneck_forward.3} parent=11 // pred_check_branch
        %171 = sbr.rel (%p169) target = $region16
      $region15: #{bottleneck_forward.3} parent=11 // pred_region
        %p172 = scmp.lt.s32.totalorder %s20, 0
        %s173 = scalar_select %p172, %s20, 0
        %s174 = smul.addr %s173, 4
        %s175 = scalar_lea.vmem %s1, %s174
      $region16: #{bottleneck_forward.3} parent=11 // pred_fallthru
        _
      // Predicated region
      $region17: #{bottleneck_forward.3} parent=11 // pred_check
        %p176 = pneg %p100
      $region18: #{bottleneck_forward.3} parent=11 // pred_check_branch
        %178 = sbr.rel (%p176) target = $region20
      $region19: #{bottleneck_forward.3} parent=11 // pred_region
        %p179 = scmp.lt.s32.totalorder %s20, 0
        %s180 = scalar_select %p179, %s20, 0
        %s181 = scalar_lea.vmem %s2, %s180
      $region20: #{bottleneck_forward.3} parent=11 // pred_fallthru
        _
      // Predicated region
      $region21: #{bottleneck_forward.3} parent=11 // pred_check
        %p182 = pneg %p126
      $region22: #{bottleneck_forward.3} parent=11 // pred_check_branch
        %184 = sbr.rel (%p182) target = $region24
      $region23: #{bottleneck_forward.3} parent=11 // pred_region
        %p185 = scmp.lt.s32.totalorder %s20, 0
        %s186 = scalar_select %p185, %s20, 0
        %s187 = scalar_lea.vmem %s3, %s186
      $region24: #{bottleneck_forward.3} parent=11 // pred_fallthru
        _
    $region12: #{bottleneck_forward.3} parent=5 // pred_fallthru
      _
    %p188 = scmp.lt.s32.totalorder %s10, 4
    // Predicated region
    $region25: #{bottleneck_forward.3} parent=5 // pred_check
      %p189 = pneg %p188
    $region26: #{bottleneck_forward.3} parent=5 // pred_check_branch
      %191 = sbr.rel (%p189) target = $region28
    $region27: #{bottleneck_forward.3} parent=5 // pred_region
      // Predicated region
      $region29: #{bottleneck_forward.3} parent=27 // pred_check
        %p192 = pneg %p42
      $region30: #{bottleneck_forward.3} parent=27 // pred_check_branch
        %194 = sbr.rel (%p192) target = $region32
      $region31: #{bottleneck_forward.3} parent=27 // pred_region
        %s195 = smul.u32 16, %s17
        %p196 = scmp.lt.s32.totalorder %s195, 63
        %s197 = scalar_select %p196, %s195, 63
        %s198 = smul.addr %s197, 4
        %s199 = scalar_lea.vmem %s0, %s198
        %s200 = smul.u32 16, %s17
      $region32: #{bottleneck_forward.3} parent=27 // pred_fallthru
        _
    $region28: #{bottleneck_forward.3} parent=5 // pred_fallthru
      _
    %p201 = scmp.le.s32.totalorder 1, %s10
    %p202 = scmp.lt.s32.totalorder %s10, 5
    %p203 = pnand %p201, %p202
    %p204 = pneg %p203
    // Predicated region
    $region33: #{bottleneck_forward.3} parent=5 // pred_check
      _
    $region34: #{bottleneck_forward.3} parent=5 // pred_check_branch
      %206 = sbr.rel (%p203) target = $region36
    $region35: #{bottleneck_forward.3} parent=5 // pred_region
      %s207 = ssub.s32 %s10, 1
      %s208 = smul.u32 16, %s19
      %p209 = scmp.lt.s32.totalorder %s208, 63
      %s210 = scalar_select %p209, %s208, 63
      %s211 = smul.addr %s210, 4
      %s212 = scalar_lea.vmem %s0, %s211
      %p213 = pneg %p48
      %p214 = pneg %p45
      %p215 = scmp.lt.s32.totalorder %s20, 0
      %s216 = scalar_select %p215, %s20, 0
      %s217 = smul.addr %s216, 4
      %s218 = scalar_lea.vmem %s1, %s217
      %p219 = pneg %p74
      %p220 = pneg %p71
      %p221 = scmp.lt.s32.totalorder %s20, 0
      %s222 = scalar_select %p221, %s20, 0
      %s223 = scalar_lea.vmem %s2, %s222
      %p224 = pneg %p100
      %p225 = pneg %p97
      %p226 = scmp.lt.s32.totalorder %s20, 0
      %s227 = scalar_select %p226, %s20, 0
      %s228 = scalar_lea.vmem %s3, %s227
      %p229 = pneg %p126
      %p230 = pneg %p123
      %p231 = pneg %p154
      %p232 = pneg %p151
      %s233 = smul.u32 16, %s19
      %p234 = scmp.lt.s32.totalorder %s233, 63
      %s235 = scalar_select %p234, %s233, 63
      %p236 = scmp.lt.s32.totalorder %s20, 0
      %s237 = scalar_select %p236, %s20, 0
      %s238 = sadd.s32 %s237, %s235
      %s239 = smul.addr %s238, 4
      %s240 = scalar_lea.vmem %s4, %s239
      %s241 = smul.u32 16, %s19
      %p242 = scmp.lt.s32.totalorder %s241, 63
      %s243 = scalar_select %p242, %s241, 63
      %s244 = smul.addr %s243, 4
      %s245 = scalar_lea.vmem %s0, %s244
      %s246 = smul.u32 16, %s19
      %p247 = scmp.lt.s32.totalorder %s20, 0
      %s248 = scalar_select %p247, %s20, 0
      %s249 = smul.addr %s248, 4
      %s250 = scalar_lea.vmem %s1, %s249
      %p251 = scmp.lt.s32.totalorder %s20, 0
      %s252 = scalar_select %p251, %s20, 0
      %s253 = scalar_lea.vmem %s2, %s252
      %p254 = scmp.lt.s32.totalorder %s20, 0
      %s255 = scalar_select %p254, %s20, 0
      %s256 = scalar_lea.vmem %s3, %s255
      %s257 = smul.u32 16, %s19
      %p258 = scmp.lt.s32.totalorder %s257, 63
      %s259 = scalar_select %p258, %s257, 63
      %p260 = scmp.lt.s32.totalorder %s20, 0
      %s261 = scalar_select %p260, %s20, 0
      %s262 = sadd.s32 %s261, %s259
      %s263 = smul.addr %s262, 4
      %s264 = scalar_lea.vmem %s4, %s263
      %s265 = smul.u32 16, %s19
      %v267 = vld [vmem:[%s245] sm:$0xf]
      %v268 = vld [vmem:[%s245 + $0x4] sm:$0xf]
      %v269 = vld [vmem:[%s245 + $0x8] sm:$0xf]
      %v270 = vld [vmem:[%s245 + $0xc] sm:$0xf]
      %v271 = vld [vmem:[%s245 + $0x10] sm:$0xf]
      %v272 = vld [vmem:[%s245 + $0x14] sm:$0xf]
      %v273 = vld [vmem:[%s245 + $0x18] sm:$0xf]
      %v274 = vld [vmem:[%s245 + $0x1c] sm:$0xf]
      %v275 = vld [vmem:[%s245 + $0x20] sm:$0xf]
      %v276 = vld [vmem:[%s245 + $0x24] sm:$0xf]
      %v277 = vld [vmem:[%s245 + $0x28] sm:$0xf]
      %v278 = vld [vmem:[%s245 + $0x2c] sm:$0xf]
      %v279 = vld [vmem:[%s245 + $0x30] sm:$0xf]
      %v280 = vld [vmem:[%s245 + $0x34] sm:$0xf]
      %v281 = vld [vmem:[%s245 + $0x38] sm:$0xf]
      %v282 = vld [vmem:[%s245 + $0x3c] sm:$0xf]
      %v283 = vld [vmem:[%s250] sm:$0xf]
      %v284 = vld [vmem:[%s250 + $0x4] sm:$0xf]
      %v285 = vld [vmem:[%s250 + $0x8] sm:$0xf]
      %v286 = vld [vmem:[%s250 + $0xc] sm:$0xf]
      %v287 = vld [vmem:[%s253] sm:$0x1]
      %v289 = vlaneseq
      %v290 = vshrl.u32 %v289, 7
      %v291 = vsub.s32 0, %v290
      %v292 = vrot.slane %v287, %v291
      %v310 = vunpack.c.l.b16 %v267
      %v311 = vunpack.c.l.b16 %v268
      %v312 = vunpack.c.l.b16 %v269
      %v313 = vunpack.c.l.b16 %v270
      %v314 = vunpack.c.l.b16 %v271
      %v315 = vunpack.c.l.b16 %v272
      %v316 = vunpack.c.l.b16 %v273
      %v317 = vunpack.c.l.b16 %v274
      %v318 = vunpack.c.l.b16 %v275
      %v319 = vunpack.c.l.b16 %v276
      %v320 = vunpack.c.l.b16 %v277
      %v321 = vunpack.c.l.b16 %v278
      %v322 = vunpack.c.l.b16 %v279
      %v323 = vunpack.c.l.b16 %v280
      %v324 = vunpack.c.l.b16 %v281
      %v325 = vunpack.c.l.b16 %v282
      %v326 = vpack.c.b16 %v311, %v310
      %v327 = vpack.c.b16 %v313, %v312
      %v328 = vpack.c.b16 %v315, %v314
      %v329 = vpack.c.b16 %v317, %v316
      %v330 = vpack.c.b16 %v319, %v318
      %v331 = vpack.c.b16 %v321, %v320
      %v332 = vpack.c.b16 %v323, %v322
      %v333 = vpack.c.b16 %v325, %v324
      %v338 = vunpack.c.l.b16 %v283
      %v339 = vunpack.c.l.b16 %v284
      %v340 = vunpack.c.l.b16 %v285
      %v341 = vunpack.c.l.b16 %v286
      %v342 = vpack.c.b16 %v339, %v338
      %v343 = vpack.c.b16 %v341, %v340
      %vm346 = vcmask 261120
      %v348 = vsel %vm346, %v326, 0
      %v351 = vsel %vm346, %v327, 0
      %v354 = vsel %vm346, %v328, 0
      %v357 = vsel %vm346, %v329, 0
      %v360 = vsel %vm346, %v330, 0
      %v363 = vsel %vm346, %v331, 0
      %v366 = vsel %vm346, %v332, 0
      %v369 = vsel %vm346, %v333, 0
      %371 = vmatprep.subr.bf16.mxu0 0
      %372 = vmatpush1.bf16.msra.mxu0 %v342
      %373 = vmatprep.subr.bf16.mxu0 0
      %374 = vmatpush1.bf16.msra.mxu0 %v343
      %375 = vmatprep.subr.bf16.mxu0 0
      %376 = vmatpush1.bf16.msra.mxu0 0
      %377 = vmatprep.subr.bf16.mxu0 0
      %378 = vmatpush1.bf16.msra.mxu0 0
      %379 = vmatprep.subr.bf16.mxu0 0
      %380 = vmatpush1.bf16.msra.mxu0 0
      %381 = vmatprep.subr.bf16.mxu0 0
      %382 = vmatpush1.bf16.msra.mxu0 0
      %383 = vmatprep.subr.bf16.mxu0 0
      %384 = vmatpush1.bf16.msra.mxu0 0
      %385 = vmatprep.subr.bf16.mxu0 0
      %386 = vmatpush1.bf16.msra.mxu0 0
      %387 = vmatprep.subr.bf16.mxu0 0
      %388 = vmatpush1.bf16.msra.mxu0 0
      %389 = vmatprep.subr.bf16.mxu0 0
      %390 = vmatpush1.bf16.msra.mxu0 0
      %391 = vmatprep.subr.bf16.mxu0 0
      %392 = vmatpush1.bf16.msra.mxu0 0
      %393 = vmatprep.subr.bf16.mxu0 0
      %394 = vmatpush1.bf16.msra.mxu0 0
      %395 = vmatprep.subr.bf16.mxu0 0
      %396 = vmatpush1.bf16.msra.mxu0 0
      %397 = vmatprep.subr.bf16.mxu0 0
      %398 = vmatpush1.bf16.msra.mxu0 0
      %399 = vmatprep.subr.bf16.mxu0 0
      %400 = vmatpush1.bf16.msra.mxu0 0
      %401 = vmatprep.subr.bf16.mxu0 0
      %402 = vmatpush1.bf16.msra.mxu0 0
      %403 = vmatprep.mubr.bf16.mxu0 0
      %404 = vmatmul.mubr.bf16.gmra.mrb[0].mxu0 %v348
      %v405 = vpop.f32.mrb[0].mxu0
      %v406 = vadd.f32 %v292, %v405
      %v407 = vpop.f32.mrb[0].mxu0
      %v408 = vpop.f32.mrb[0].mxu0
      %v409 = vadd.f32 %v292, %v408
      %v410 = vpop.f32.mrb[0].mxu0
      %411 = vmatprep.mubr.bf16.mxu0 0
      %412 = vmatmul.mubr.bf16.gmra.mrb[0].mxu0 %v351
      %v413 = vpop.f32.mrb[0].mxu0
      %v414 = vadd.f32 %v292, %v413
      %v415 = vpop.f32.mrb[0].mxu0
      %v416 = vpop.f32.mrb[0].mxu0
      %v417 = vadd.f32 %v292, %v416
      %v418 = vpop.f32.mrb[0].mxu0
      %419 = vmatprep.mubr.bf16.mxu0 0
      %420 = vmatmul.mubr.bf16.gmra.mrb[0].mxu0 %v354
      %v421 = vpop.f32.mrb[0].mxu0
      %v422 = vadd.f32 %v292, %v421
      %v423 = vpop.f32.mrb[0].mxu0
      %v424 = vpop.f32.mrb[0].mxu0
      %v425 = vadd.f32 %v292, %v424
      %v426 = vpop.f32.mrb[0].mxu0
      %427 = vmatprep.mubr.bf16.mxu0 0
      %428 = vmatmul.mubr.bf16.gmra.mrb[0].mxu0 %v357
      %v429 = vpop.f32.mrb[0].mxu0
      %v430 = vadd.f32 %v292, %v429
      %v431 = vpop.f32.mrb[0].mxu0
      %v432 = vpop.f32.mrb[0].mxu0
      %v433 = vadd.f32 %v292, %v432
      %v434 = vpop.f32.mrb[0].mxu0
      %435 = vmatprep.mubr.bf16.mxu0 0
      %436 = vmatmul.mubr.bf16.gmra.mrb[0].mxu0 %v360
      %v437 = vpop.f32.mrb[0].mxu0
      %v438 = vadd.f32 %v292, %v437
      %v439 = vpop.f32.mrb[0].mxu0
      %v440 = vpop.f32.mrb[0].mxu0
      %v441 = vadd.f32 %v292, %v440
      %v442 = vpop.f32.mrb[0].mxu0
      %443 = vmatprep.mubr.bf16.mxu0 0
      %444 = vmatmul.mubr.bf16.gmra.mrb[0].mxu0 %v363
      %v445 = vpop.f32.mrb[0].mxu0
      %v446 = vadd.f32 %v292, %v445
      %v447 = vpop.f32.mrb[0].mxu0
      %v448 = vpop.f32.mrb[0].mxu0
      %v449 = vadd.f32 %v292, %v448
      %v450 = vpop.f32.mrb[0].mxu0
      %451 = vmatprep.mubr.bf16.mxu0 0
      %452 = vmatmul.mubr.bf16.gmra.mrb[0].mxu0 %v366
      %v453 = vpop.f32.mrb[0].mxu0
      %v454 = vadd.f32 %v292, %v453
      %v455 = vpop.f32.mrb[0].mxu0
      %v456 = vpop.f32.mrb[0].mxu0
      %v457 = vadd.f32 %v292, %v456
      %v458 = vpop.f32.mrb[0].mxu0
      %459 = vmatprep.mubr.bf16.mxu0 0
      %460 = vmatmul.mubr.bf16.gmra.mrb[0].mxu0 %v369
      %v461 = vpop.f32.mrb[0].mxu0
      %v462 = vadd.f32 %v292, %v461
      %v463 = vpop.f32.mrb[0].mxu0
      %v464 = vpop.f32.mrb[0].mxu0
      %v465 = vadd.f32 %v292, %v464
      %v466 = vpop.f32.mrb[0].mxu0
      %467 = vdwg.mxu0
      %vm468 = vcmp.gt.f32.partialorder %v406, 0.0
      %vm469 = vcmp.gt.f32.partialorder %v409, 0.0
      %vm470 = vcmp.gt.f32.partialorder %v414, 0.0
      %vm471 = vcmp.gt.f32.partialorder %v417, 0.0
      %vm472 = vcmp.gt.f32.partialorder %v422, 0.0
      %vm473 = vcmp.gt.f32.partialorder %v425, 0.0
      %vm474 = vcmp.gt.f32.partialorder %v430, 0.0
      %vm475 = vcmp.gt.f32.partialorder %v433, 0.0
      %vm476 = vcmp.gt.f32.partialorder %v438, 0.0
      %vm477 = vcmp.gt.f32.partialorder %v441, 0.0
      %vm478 = vcmp.gt.f32.partialorder %v446, 0.0
      %vm479 = vcmp.gt.f32.partialorder %v449, 0.0
      %vm480 = vcmp.gt.f32.partialorder %v454, 0.0
      %vm481 = vcmp.gt.f32.partialorder %v457, 0.0
      %vm482 = vcmp.gt.f32.partialorder %v462, 0.0
      %vm483 = vcmp.gt.f32.partialorder %v465, 0.0
      %v484 = vld [vmem:[%s256] sm:$0x1]
      %v486 = vlaneseq
      %v487 = vshrl.u32 %v486, 7
      %v488 = vsub.s32 0, %v487
      %v489 = vrot.slane %v484, %v488
      %v491 = vmul.f32 %v406, %v489
      %v492 = vmul.f32 %v409, %v489
      %v493 = vmul.f32 %v414, %v489
      %v494 = vmul.f32 %v417, %v489
      %v495 = vmul.f32 %v422, %v489
      %v496 = vmul.f32 %v425, %v489
      %v497 = vmul.f32 %v430, %v489
      %v498 = vmul.f32 %v433, %v489
      %v499 = vmul.f32 %v438, %v489
      %v500 = vmul.f32 %v441, %v489
      %v501 = vmul.f32 %v446, %v489
      %v502 = vmul.f32 %v449, %v489
      %v503 = vmul.f32 %v454, %v489
      %v504 = vmul.f32 %v457, %v489
      %v505 = vmul.f32 %v462, %v489
      %v506 = vmul.f32 %v465, %v489
      %v507 = vsel %vm468, %v406, %v491
      %v508 = vsel %vm469, %v409, %v492
      %v509 = vsel %vm470, %v414, %v493
      %v510 = vsel %vm471, %v417, %v494
      %v511 = vsel %vm472, %v422, %v495
      %v512 = vsel %vm473, %v425, %v496
      %v513 = vsel %vm474, %v430, %v497
      %v514 = vsel %vm475, %v433, %v498
      %v515 = vsel %vm476, %v438, %v499
      %v516 = vsel %vm477, %v441, %v500
      %v517 = vsel %vm478, %v446, %v501
      %v518 = vsel %vm479, %v449, %v502
      %v519 = vsel %vm480, %v454, %v503
      %v520 = vsel %vm481, %v457, %v504
      %v521 = vsel %vm482, %v462, %v505
      %v522 = vsel %vm483, %v465, %v506
      %v523 = vpack.c.bf16 %v508, %v507
      %v524 = vpack.c.bf16 %v510, %v509
      %v525 = vpack.c.bf16 %v512, %v511
      %v526 = vpack.c.bf16 %v514, %v513
      %v527 = vpack.c.bf16 %v516, %v515
      %v528 = vpack.c.bf16 %v518, %v517
      %v529 = vpack.c.bf16 %v520, %v519
      %v530 = vpack.c.bf16 %v522, %v521
      %v539 = vunpack.c.l.b16 %v523
      %v540 = vunpack.c.h.b16 %v523
      %v541 = vunpack.c.l.b16 %v524
      %v542 = vunpack.c.h.b16 %v524
      %v543 = vunpack.c.l.b16 %v525
      %v544 = vunpack.c.h.b16 %v525
      %v545 = vunpack.c.l.b16 %v526
      %v546 = vunpack.c.h.b16 %v526
      %v547 = vunpack.c.l.b16 %v527
      %v548 = vunpack.c.h.b16 %v527
      %v549 = vunpack.c.l.b16 %v528
      %v550 = vunpack.c.h.b16 %v528
      %v551 = vunpack.c.l.b16 %v529
      %v552 = vunpack.c.h.b16 %v529
      %v553 = vunpack.c.l.b16 %v530
      %v554 = vunpack.c.h.b16 %v530
      %v555 = vpack.c.b16 %v539, %v539
      %v556 = vpack.c.b16 %v540, %v540
      %v557 = vpack.c.b16 %v541, %v541
      %v558 = vpack.c.b16 %v542, %v542
      %v559 = vpack.c.b16 %v543, %v543
      %v560 = vpack.c.b16 %v544, %v544
      %v561 = vpack.c.b16 %v545, %v545
      %v562 = vpack.c.b16 %v546, %v546
      %v563 = vpack.c.b16 %v547, %v547
      %v564 = vpack.c.b16 %v548, %v548
      %v565 = vpack.c.b16 %v549, %v549
      %v566 = vpack.c.b16 %v550, %v550
      %v567 = vpack.c.b16 %v551, %v551
      %v568 = vpack.c.b16 %v552, %v552
      %v569 = vpack.c.b16 %v553, %v553
      %v570 = vpack.c.b16 %v554, %v554
      %vm587 = vcmask 519168
      %588 = vst.msk [vmem:[%s264] sm:$0xf] %vm587, %v555
      %589 = vst.msk [vmem:[%s264 + $0x4] sm:$0xf] %vm587, %v556
      %590 = vst.msk [vmem:[%s264 + $0x8] sm:$0xf] %vm587, %v557
      %591 = vst.msk [vmem:[%s264 + $0xc] sm:$0xf] %vm587, %v558
      %592 = vst.msk [vmem:[%s264 + $0x10] sm:$0xf] %vm587, %v559
      %593 = vst.msk [vmem:[%s264 + $0x14] sm:$0xf] %vm587, %v560
      %594 = vst.msk [vmem:[%s264 + $0x18] sm:$0xf] %vm587, %v561
      %595 = vst.msk [vmem:[%s264 + $0x1c] sm:$0xf] %vm587, %v562
      %596 = vst.msk [vmem:[%s264 + $0x20] sm:$0xf] %vm587, %v563
      %597 = vst.msk [vmem:[%s264 + $0x24] sm:$0xf] %vm587, %v564
      %598 = vst.msk [vmem:[%s264 + $0x28] sm:$0xf] %vm587, %v565
      %599 = vst.msk [vmem:[%s264 + $0x2c] sm:$0xf] %vm587, %v566
      %600 = vst.msk [vmem:[%s264 + $0x30] sm:$0xf] %vm587, %v567
      %601 = vst.msk [vmem:[%s264 + $0x34] sm:$0xf] %vm587, %v568
      %602 = vst.msk [vmem:[%s264 + $0x38] sm:$0xf] %vm587, %v569
      %603 = vst.msk [vmem:[%s264 + $0x3c] sm:$0xf] %vm587, %v570
      %s604 = smul.u32 16, %s19
      %p605 = scmp.lt.s32.totalorder %s604, 63
      %s606 = scalar_select %p605, %s604, 63
      %p607 = scmp.lt.s32.totalorder %s20, 0
      %s608 = scalar_select %p607, %s20, 0
      %s609 = sadd.s32 %s608, %s606
      %s610 = smul.addr %s609, 4
      %s611 = scalar_lea.vmem %s4, %s610
      // Predicated region
      $region37: #{bottleneck_forward.3} parent=35 // pred_check
        %p612 = pneg %p151
      $region38: #{bottleneck_forward.3} parent=35 // pred_check_branch
        %614 = sbr.rel (%p612) target = $region40
      $region39: #{bottleneck_forward.3} parent=35 // pred_region
        %s615 = smul.u32 16, %s19
      $region40: #{bottleneck_forward.3} parent=35 // pred_fallthru
        _
    $region36: #{bottleneck_forward.3} parent=5 // pred_fallthru
      _
    %p616 = scmp.le.s32.totalorder 2, %s10
    // Predicated region
    $region41: #{bottleneck_forward.3} parent=5 // pred_check
      %p617 = pneg %p616
    $region42: #{bottleneck_forward.3} parent=5 // pred_check_branch
      %619 = sbr.rel (%p617) target = $region44
    $region43: #{bottleneck_forward.3} parent=5 // pred_region
      %s620 = ssub.s32 %s10, 2
      // Predicated region
      $region45: #{bottleneck_forward.3} parent=43 // pred_check
        %p621 = pneg %p157
      $region46: #{bottleneck_forward.3} parent=43 // pred_check_branch
        %623 = sbr.rel (%p621) target = $region48
      $region47: #{bottleneck_forward.3} parent=43 // pred_region
        %s624 = smul.u32 16, %s21
        %p625 = scmp.lt.s32.totalorder %s624, 63
        %s626 = scalar_select %p625, %s624, 63
        %p627 = scmp.lt.s32.totalorder %s22, 0
        %s628 = scalar_select %p627, %s22, 0
        %s629 = sadd.s32 %s628, %s626
        %s630 = smul.addr %s629, 4
        %s631 = scalar_lea.vmem %s4, %s630
      $region48: #{bottleneck_forward.3} parent=43 // pred_fallthru
        _
    $region44: #{bottleneck_forward.3} parent=5 // pred_fallthru
      _
  $region6: #{bottleneck_forward.3} parent=0 // loop_footer
    %s14 = sadd.s32 1, %s10
  $region7: #{bottleneck_forward.3} parent=0 // loop_footer_branch
    %9 = sbr.rel target = $region3
  $region8: #{bottleneck_forward.3} parent=0 // loop_exit
    _

// kernel: bottleneck_forward.4
$region0: #{bottleneck_forward.4}
  #allocation0 [shape = 'u32[]', space=smem, size = 0x4, offset = 0x4, fixed_abs, tag = 'smem constant byte address 0x4 - core index']
  #allocation1 [shape = 'u32[144,128]{1,0:T(1,128)}', space=vmem, size = 0x12000, scoped, tag = 'internal scratch']
  #allocation2 [shape = 'f32[18,18,64]{2,1,0:T(8,128)}', space=vmem, size = 0x36000, scoped, tag = 'scratch operand']
  %s0 = inlined_call_operand.vmem [shape: bf16[2,16,16,64], index: 0, kind: input, shape index: {}]
  %s1 = inlined_call_operand.vmem [shape: f32[3,3,64], index: 1, kind: input, shape index: {}]
  %s2 = inlined_call_operand.vmem [shape: f32[1,1,64], index: 2, kind: input, shape index: {}]
  %s3 = inlined_call_operand.vmem [shape: f32[1,1,64], index: 3, kind: input, shape index: {}]
  %s4 = inlined_call_operand.vmem [shape: bf16[2,16,16,64], index: 4, kind: output, shape index: {}]
  %s5 = sld [smem:[#allocation0]]
  $region53: #{bottleneck_forward.4} parent=0
    _
  %s7 = ssub.s32 1, %s5
  %s8 = scalar_select 0, %s7, %s5
  loop: start=0, step=1, limit=6
  $region2: #{bottleneck_forward.4} parent=0 // loop_pre_header
    _
  $region3: #{bottleneck_forward.4} parent=0 // loop_header
    %s10 = sphi 0, %s14
    %p11 = scmp.ge.s32.totalorder %s10, 6
    %s17 = sphi 0, %s36
    %s18 = sphi 0, %s32
    %s19 = sphi 0, %s28
    %s20 = sphi 0, %s17
    %s21 = sphi 0, %s18
    %s22 = sphi 0, %s19
    %s23 = sphi 0, %s20
    %s24 = sphi 0, %s21
    %s25 = sphi 0, %s22
    %s41 = sphi 0, %s43
    %s44 = sphi 0, %s41
    %s45 = sphi 0, %s44
    %s61 = sphi 0, %s45
    %s67 = sphi 0, %s69
    %s70 = sphi 0, %s67
    %s71 = sphi 0, %s70
    %s87 = sphi 0, %s71
    %s93 = sphi 0, %s95
    %s96 = sphi 0, %s93
    %s97 = sphi 0, %s96
    %s113 = sphi 0, %s97
    %s119 = sphi 0, %s121
    %s122 = sphi 0, %s119
    %s123 = sphi 0, %s122
    %s139 = sphi 0, %s123
    %s149 = sphi 0, %s151
    %s152 = sphi 0, %s149
    %s153 = sphi 0, %s152
    %s169 = sphi 0, %s153
  $region4: #{bottleneck_forward.4} parent=0 // loop_header_branch
    %13 = sbr.rel (%p11) target = $region8
  $region5: #{bottleneck_forward.4} parent=0 // loop_body
    %s15 = ssub.s32 %s10, 1
    %s16 = ssub.s32 %s10, 2
    %s26 = sadd.s32 1, %s19
    %p27 = scmp.ge.s32.totalorder %s26, 2
    %s28 = scalar_select %p27, 0, %s26
    %s29 = sadd.s32 1, %s18
    %s30 = scalar_select %p27, %s29, %s18
    %p31 = scmp.ge.s32.totalorder %s30, 1
    %s32 = scalar_select %p31, 0, %s30
    %s33 = sadd.s32 1, %s17
    %s34 = scalar_select %p31, %s33, %s17
    %p35 = scmp.ge.s32.totalorder %s34, 2
    %s36 = scalar_select %p35, 0, %s34
    %s37 = ssub.s32 %s17, %s36
    %s38 = ssub.s32 %s18, %s32
    %s39 = sor.u32 %s37, %s38
    %p40 = scmp.eq.s32.totalorder %s39, 0
    %s42 = sadd.s32 %s41, 1
    %s43 = scalar_select %p40, %s41, %s42
    %p46 = pneg %p40
    %p47 = scmp.eq.s32.totalorder %s10, 3
    %p48 = por %p46, %p47
    %p49 = scmp.ne.s32.totalorder %s41, %s44
    %p50 = scmp.eq.s32.totalorder %s10, 0
    %p51 = por %p49, %p50
    %p52 = scmp.ne.s32.totalorder %s41, %s44
    %p53 = scmp.eq.s32.totalorder %s15, 3
    %p54 = por %p52, %p53
    %p55 = scmp.ne.s32.totalorder %s44, %s45
    %p56 = scmp.eq.s32.totalorder %s15, 0
    %p57 = por %p55, %p56
    %p58 = scmp.ne.s32.totalorder %s44, %s45
    %p59 = scmp.eq.s32.totalorder %s16, 3
    %p60 = por %p58, %p59
    %p62 = scmp.ne.s32.totalorder %s45, %s61
    %p63 = scmp.eq.s32.totalorder %s16, 0
    %p64 = por %p62, %p63
    %s65 = ssub.s32 %s18, %s32
    %p66 = scmp.eq.s32.totalorder %s65, 0
    %s68 = sadd.s32 %s67, 1
    %s69 = scalar_select %p66, %s67, %s68
    %p72 = pneg %p66
    %p73 = scmp.eq.s32.totalorder %s10, 3
    %p74 = por %p72, %p73
    %p75 = scmp.ne.s32.totalorder %s67, %s70
    %p76 = scmp.eq.s32.totalorder %s10, 0
    %p77 = por %p75, %p76
    %p78 = scmp.ne.s32.totalorder %s67, %s70
    %p79 = scmp.eq.s32.totalorder %s15, 3
    %p80 = por %p78, %p79
    %p81 = scmp.ne.s32.totalorder %s70, %s71
    %p82 = scmp.eq.s32.totalorder %s15, 0
    %p83 = por %p81, %p82
    %p84 = scmp.ne.s32.totalorder %s70, %s71
    %p85 = scmp.eq.s32.totalorder %s16, 3
    %p86 = por %p84, %p85
    %p88 = scmp.ne.s32.totalorder %s71, %s87
    %p89 = scmp.eq.s32.totalorder %s16, 0
    %p90 = por %p88, %p89
    %s91 = ssub.s32 %s18, %s32
    %p92 = scmp.eq.s32.totalorder %s91, 0
    %s94 = sadd.s32 %s93, 1
    %s95 = scalar_select %p92, %s93, %s94
    %p98 = pneg %p92
    %p99 = scmp.eq.s32.totalorder %s10, 3
    %p100 = por %p98, %p99
    %p101 = scmp.ne.s32.totalorder %s93, %s96
    %p102 = scmp.eq.s32.totalorder %s10, 0
    %p103 = por %p101, %p102
    %p104 = scmp.ne.s32.totalorder %s93, %s96
    %p105 = scmp.eq.s32.totalorder %s15, 3
    %p106 = por %p104, %p105
    %p107 = scmp.ne.s32.totalorder %s96, %s97
    %p108 = scmp.eq.s32.totalorder %s15, 0
    %p109 = por %p107, %p108
    %p110 = scmp.ne.s32.totalorder %s96, %s97
    %p111 = scmp.eq.s32.totalorder %s16, 3
    %p112 = por %p110, %p111
    %p114 = scmp.ne.s32.totalorder %s97, %s113
    %p115 = scmp.eq.s32.totalorder %s16, 0
    %p116 = por %p114, %p115
    %s117 = ssub.s32 %s18, %s32
    %p118 = scmp.eq.s32.totalorder %s117, 0
    %s120 = sadd.s32 %s119, 1
    %s121 = scalar_select %p118, %s119, %s120
    %p124 = pneg %p118
    %p125 = scmp.eq.s32.totalorder %s10, 3
    %p126 = por %p124, %p125
    %p127 = scmp.ne.s32.totalorder %s119, %s122
    %p128 = scmp.eq.s32.totalorder %s10, 0
    %p129 = por %p127, %p128
    %p130 = scmp.ne.s32.totalorder %s119, %s122
    %p131 = scmp.eq.s32.totalorder %s15, 3
    %p132 = por %p130, %p131
    %p133 = scmp.ne.s32.totalorder %s122, %s123
    %p134 = scmp.eq.s32.totalorder %s15, 0
    %p135 = por %p133, %p134
    %p136 = scmp.ne.s32.totalorder %s122, %s123
    %p137 = scmp.eq.s32.totalorder %s16, 3
    %p138 = por %p136, %p137
    %p140 = scmp.ne.s32.totalorder %s123, %s139
    %p141 = scmp.eq.s32.totalorder %s16, 0
    %p142 = por %p140, %p141
    %s143 = ssub.s32 %s17, %s36
    %s144 = ssub.s32 %s19, %s28
    %s145 = sor.u32 %s143, %s144
    %s146 = ssub.s32 %s18, %s32
    %s147 = sor.u32 %s145, %s146
    %p148 = scmp.eq.s32.totalorder %s147, 0
    %s150 = sadd.s32 %s149, 1
    %s151 = scalar_select %p148, %s149, %s150
    %p154 = pneg %p148
    %p155 = scmp.eq.s32.totalorder %s10, 3
    %p156 = por %p154, %p155
    %p157 = scmp.ne.s32.totalorder %s149, %s152
    %p158 = scmp.eq.s32.totalorder %s10, 0
    %p159 = por %p157, %p158
    %p160 = scmp.ne.s32.totalorder %s149, %s152
    %p161 = scmp.eq.s32.totalorder %s15, 3
    %p162 = por %p160, %p161
    %p163 = scmp.ne.s32.totalorder %s152, %s153
    %p164 = scmp.eq.s32.totalorder %s15, 0
    %p165 = por %p163, %p164
    %p166 = scmp.ne.s32.totalorder %s152, %s153
    %p167 = scmp.eq.s32.totalorder %s16, 3
    %p168 = por %p166, %p167
    %p170 = scmp.ne.s32.totalorder %s153, %s169
    %p171 = scmp.eq.s32.totalorder %s16, 0
    %p172 = por %p170, %p171
    %p173 = scmp.le.s32.totalorder 1, %s10
    %p174 = scmp.lt.s32.totalorder %s10, 5
    %p175 = pnand %p173, %p174
    %p176 = pneg %p175
    // Predicated region
    $region9: #{bottleneck_forward.4} parent=5 // pred_check
      _
    $region10: #{bottleneck_forward.4} parent=5 // pred_check_branch
      %178 = sbr.rel (%p175) target = $region12
    $region11: #{bottleneck_forward.4} parent=5 // pred_region
      %s179 = ssub.s32 %s10, 1
      // Predicated region
      $region13: #{bottleneck_forward.4} parent=11 // pred_check
        %p180 = pneg %p83
      $region14: #{bottleneck_forward.4} parent=11 // pred_check_branch
        %182 = sbr.rel (%p180) target = $region16
      $region15: #{bottleneck_forward.4} parent=11 // pred_region
        %p183 = scmp.lt.s32.totalorder %s21, 0
        %s184 = scalar_select %p183, %s21, 0
        %s185 = smul.addr %s184, 4
        %s186 = scalar_lea.vmem %s1, %s185
      $region16: #{bottleneck_forward.4} parent=11 // pred_fallthru
        _
      // Predicated region
      $region17: #{bottleneck_forward.4} parent=11 // pred_check
        %p187 = pneg %p109
      $region18: #{bottleneck_forward.4} parent=11 // pred_check_branch
        %189 = sbr.rel (%p187) target = $region20
      $region19: #{bottleneck_forward.4} parent=11 // pred_region
        %p190 = scmp.lt.s32.totalorder %s21, 0
        %s191 = scalar_select %p190, %s21, 0
        %s192 = scalar_lea.vmem %s2, %s191
      $region20: #{bottleneck_forward.4} parent=11 // pred_fallthru
        _
      // Predicated region
      $region21: #{bottleneck_forward.4} parent=11 // pred_check
        %p193 = pneg %p135
      $region22: #{bottleneck_forward.4} parent=11 // pred_check_branch
        %195 = sbr.rel (%p193) target = $region24
      $region23: #{bottleneck_forward.4} parent=11 // pred_region
        %p196 = scmp.lt.s32.totalorder %s21, 0
        %s197 = scalar_select %p196, %s21, 0
        %s198 = scalar_lea.vmem %s3, %s197
      $region24: #{bottleneck_forward.4} parent=11 // pred_fallthru
        _
    $region12: #{bottleneck_forward.4} parent=5 // pred_fallthru
      _
    %p199 = scmp.lt.s32.totalorder %s10, 4
    // Predicated region
    $region25: #{bottleneck_forward.4} parent=5 // pred_check
      %p200 = pneg %p199
    $region26: #{bottleneck_forward.4} parent=5 // pred_check_branch
      %202 = sbr.rel (%p200) target = $region28
    $region27: #{bottleneck_forward.4} parent=5 // pred_region
      // Predicated region
      $region29: #{bottleneck_forward.4} parent=27 // pred_check
        %p203 = pneg %p51
      $region30: #{bottleneck_forward.4} parent=27 // pred_check_branch
        %205 = sbr.rel (%p203) target = $region32
      $region31: #{bottleneck_forward.4} parent=27 // pred_region
        %p206 = scmp.lt.s32.totalorder %s17, 1
        %s207 = scalar_select %p206, %s17, 1
        %p208 = scmp.lt.s32.totalorder %s18, 0
        %s209 = scalar_select %p208, %s18, 0
        %s210 = smul.addr %s207, 32
        %s211 = sadd.s32 %s209, %s210
        %s212 = smul.addr %s211, 4
        %s213 = scalar_lea.vmem %s0, %s212
      $region32: #{bottleneck_forward.4} parent=27 // pred_fallthru
        _
    $region28: #{bottleneck_forward.4} parent=5 // pred_fallthru
      _
    %p214 = scmp.le.s32.totalorder 1, %s10
    %p215 = scmp.lt.s32.totalorder %s10, 5
    %p216 = pnand %p214, %p215
    %p217 = pneg %p216
    // Predicated region
    $region33: #{bottleneck_forward.4} parent=5 // pred_check
      _
    $region34: #{bottleneck_forward.4} parent=5 // pred_check_branch
      %219 = sbr.rel (%p216) target = $region36
    $region35: #{bottleneck_forward.4} parent=5 // pred_region
      %s220 = ssub.s32 %s10, 1
      %p221 = scmp.lt.s32.totalorder %s20, 1
      %s222 = scalar_select %p221, %s20, 1
      %p223 = scmp.lt.s32.totalorder %s21, 0
      %s224 = scalar_select %p223, %s21, 0
      %s225 = smul.addr %s222, 32
      %s226 = sadd.s32 %s224, %s225
      %s227 = smul.addr %s226, 4
      %s228 = scalar_lea.vmem %s0, %s227
      %p229 = pneg %p57
      %p230 = pneg %p54
      %p231 = scmp.lt.s32.totalorder %s21, 0
      %s232 = scalar_select %p231, %s21, 0
      %s233 = smul.addr %s232, 4
      %s234 = scalar_lea.vmem %s1, %s233
      %p235 = pneg %p83
      %p236 = pneg %p80
      %p237 = scmp.lt.s32.totalorder %s21, 0
      %s238 = scalar_select %p237, %s21, 0
      %s239 = scalar_lea.vmem %s2, %s238
      %p240 = pneg %p109
      %p241 = pneg %p106
      %p242 = scmp.lt.s32.totalorder %s21, 0
      %s243 = scalar_select %p242, %s21, 0
      %s244 = scalar_lea.vmem %s3, %s243
      %p245 = pneg %p135
      %p246 = pneg %p132
      %p247 = pneg %p165
      %p248 = pneg %p162
      %s249 = smul.u32 8, %s22
      %p250 = scmp.lt.s32.totalorder %s20, 1
      %s251 = scalar_select %p250, %s20, 1
      %p252 = scmp.lt.s32.totalorder %s249, 15
      %s253 = scalar_select %p252, %s249, 15
      %p254 = scmp.lt.s32.totalorder %s21, 0
      %s255 = scalar_select %p254, %s21, 0
      %s256 = smul.addr %s253, 2
      %s257 = sadd.s32 %s255, %s256
      %s258 = smul.addr %s251, 32
      %s259 = sadd.s32 %s257, %s258
      %s260 = smul.addr %s259, 4
      %s261 = scalar_lea.vmem %s4, %s260
      %p262 = scmp.lt.s32.totalorder %s20, 1
      %s263 = scalar_select %p262, %s20, 1
      %p264 = scmp.lt.s32.totalorder %s21, 0
      %s265 = scalar_select %p264, %s21, 0
      %s266 = smul.addr %s263, 32
      %s267 = sadd.s32 %s265, %s266
      %s268 = smul.addr %s267, 4
      %s269 = scalar_lea.vmem %s0, %s268
      %p270 = scmp.lt.s32.totalorder %s21, 0
      %s271 = scalar_select %p270, %s21, 0
      %s272 = smul.addr %s271, 4
      %s273 = scalar_lea.vmem %s1, %s272
      %p274 = scmp.lt.s32.totalorder %s21, 0
      %s275 = scalar_select %p274, %s21, 0
      %s276 = scalar_lea.vmem %s2, %s275
      %p277 = scmp.lt.s32.totalorder %s21, 0
      %s278 = scalar_select %p277, %s21, 0
      %s279 = scalar_lea.vmem %s3, %s278
      %s280 = smul.u32 8, %s22
      %p281 = scmp.lt.s32.totalorder %s20, 1
      %s282 = scalar_select %p281, %s20, 1
      %p283 = scmp.lt.s32.totalorder %s280, 15
      %s284 = scalar_select %p283, %s280, 15
      %p285 = scmp.lt.s32.totalorder %s21, 0
      %s286 = scalar_select %p285, %s21, 0
      %s287 = smul.addr %s284, 2
      %s288 = sadd.s32 %s286, %s287
      %s289 = smul.addr %s282, 32
      %s290 = sadd.s32 %s288, %s289
      %s291 = smul.addr %s290, 4
      %s292 = scalar_lea.vmem %s4, %s291
      %s293 = smul.u32 8, %s22
      %p294 = scmp.eq.s32.totalorder %s22, 0
      // Predicated region
      $region37: #{bottleneck_forward.4} parent=35 // pred_check
        %p295 = pneg %p294
      $region38: #{bottleneck_forward.4} parent=35 // pred_check_branch
        %297 = sbr.rel (%p295) target = $region40
      $region39: #{bottleneck_forward.4} parent=35 // pred_region
        %vm298 = vcmask 523264
        %299 = vst.msk [vmem:[#allocation2] sm:$0xff] %vm298, 0.0
        %300 = vst.msk [vmem:[#allocation2 + $0x8] sm:$0xff] %vm298, 0.0
        %vm301 = vcmask 517120
        %302 = vst.msk [vmem:[#allocation2 + $0x10] sm:$0x3] %vm301, 0.0
        %303 = vst.msk [vmem:[#allocation2 + $0x18] sm:$0xff] %vm298, 0.0
        %304 = vst.msk [vmem:[#allocation2 + $0x20] sm:$0xff] %vm298, 0.0
        %305 = vst.msk [vmem:[#allocation2 + $0x28] sm:$0x3] %vm301, 0.0
        %306 = vst.msk [vmem:[#allocation2 + $0x30] sm:$0xff] %vm298, 0.0
        %307 = vst.msk [vmem:[#allocation2 + $0x38] sm:$0xff] %vm298, 0.0
        %308 = vst.msk [vmem:[#allocation2 + $0x40] sm:$0x3] %vm301, 0.0
        %309 = vst.msk [vmem:[#allocation2 + $0x48] sm:$0xff] %vm298, 0.0
        %310 = vst.msk [vmem:[#allocation2 + $0x50] sm:$0xff] %vm298, 0.0
        %311 = vst.msk [vmem:[#allocation2 + $0x58] sm:$0x3] %vm301, 0.0
        %312 = vst.msk [vmem:[#allocation2 + $0x60] sm:$0xff] %vm298, 0.0
        %313 = vst.msk [vmem:[#allocation2 + $0x68] sm:$0xff] %vm298, 0.0
        %314 = vst.msk [vmem:[#allocation2 + $0x70] sm:$0x3] %vm301, 0.0
        %315 = vst.msk [vmem:[#allocation2 + $0x78] sm:$0xff] %vm298, 0.0
        %316 = vst.msk [vmem:[#allocation2 + $0x80] sm:$0xff] %vm298, 0.0
        %317 = vst.msk [vmem:[#allocation2 + $0x88] sm:$0x3] %vm301, 0.0
        %318 = vst.msk [vmem:[#allocation2 + $0x90] sm:$0xff] %vm298, 0.0
        %319 = vst.msk [vmem:[#allocation2 + $0x98] sm:$0xff] %vm298, 0.0
        %320 = vst.msk [vmem:[#allocation2 + $0xa0] sm:$0x3] %vm301, 0.0
        %321 = vst.msk [vmem:[#allocation2 + $0xa8] sm:$0xff] %vm298, 0.0
        %322 = vst.msk [vmem:[#allocation2 + $0xb0] sm:$0xff] %vm298, 0.0
        %323 = vst.msk [vmem:[#allocation2 + $0xb8] sm:$0x3] %vm301, 0.0
        %324 = vst.msk [vmem:[#allocation2 + $0xc0] sm:$0xff] %vm298, 0.0
        %325 = vst.msk [vmem:[#allocation2 + $0xc8] sm:$0xff] %vm298, 0.0
        %326 = vst.msk [vmem:[#allocation2 + $0xd0] sm:$0x3] %vm301, 0.0
        %327 = vst.msk [vmem:[#allocation2 + $0xd8] sm:$0xff] %vm298, 0.0
        %328 = vst.msk [vmem:[#allocation2 + $0xe0] sm:$0xff] %vm298, 0.0
        %329 = vst.msk [vmem:[#allocation2 + $0xe8] sm:$0x3] %vm301, 0.0
        %330 = vst.msk [vmem:[#allocation2 + $0xf0] sm:$0xff] %vm298, 0.0
        %331 = vst.msk [vmem:[#allocation2 + $0xf8] sm:$0xff] %vm298, 0.0
        %332 = vst.msk [vmem:[#allocation2 + $0x100] sm:$0x3] %vm301, 0.0
        %333 = vst.msk [vmem:[#allocation2 + $0x108] sm:$0xff] %vm298, 0.0
        %334 = vst.msk [vmem:[#allocation2 + $0x110] sm:$0xff] %vm298, 0.0
        %335 = vst.msk [vmem:[#allocation2 + $0x118] sm:$0x3] %vm301, 0.0
        %336 = vst.msk [vmem:[#allocation2 + $0x120] sm:$0xff] %vm298, 0.0
        %337 = vst.msk [vmem:[#allocation2 + $0x128] sm:$0xff] %vm298, 0.0
        %338 = vst.msk [vmem:[#allocation2 + $0x130] sm:$0x3] %vm301, 0.0
        %339 = vst.msk [vmem:[#allocation2 + $0x138] sm:$0xff] %vm298, 0.0
        %340 = vst.msk [vmem:[#allocation2 + $0x140] sm:$0xff] %vm298, 0.0
        %341 = vst.msk [vmem:[#allocation2 + $0x148] sm:$0x3] %vm301, 0.0
        %342 = vst.msk [vmem:[#allocation2 + $0x150] sm:$0xff] %vm298, 0.0
        %343 = vst.msk [vmem:[#allocation2 + $0x158] sm:$0xff] %vm298, 0.0
        %344 = vst.msk [vmem:[#allocation2 + $0x160] sm:$0x3] %vm301, 0.0
        %345 = vst.msk [vmem:[#allocation2 + $0x168] sm:$0xff] %vm298, 0.0
        %346 = vst.msk [vmem:[#allocation2 + $0x170] sm:$0xff] %vm298, 0.0
        %347 = vst.msk [vmem:[#allocation2 + $0x178] sm:$0x3] %vm301, 0.0
        %348 = vst.msk [vmem:[#allocation2 + $0x180] sm:$0xff] %vm298, 0.0
        %349 = vst.msk [vmem:[#allocation2 + $0x188] sm:$0xff] %vm298, 0.0
        %350 = vst.msk [vmem:[#allocation2 + $0x190] sm:$0x3] %vm301, 0.0
        %351 = vst.msk [vmem:[#allocation2 + $0x198] sm:$0xff] %vm298, 0.0
        %352 = vst.msk [vmem:[#allocation2 + $0x1a0] sm:$0xff] %vm298, 0.0
        %353 = vst.msk [vmem:[#allocation2 + $0x1a8] sm:$0x3] %vm301, 0.0
        %v354 = vld [vmem:[%s269] sm:$0xf]
        %v355 = vld [vmem:[%s269 + $0x4] sm:$0xf]
        %v356 = vld [vmem:[%s269 + $0x8] sm:$0xf]
        %v357 = vld [vmem:[%s269 + $0xc] sm:$0xf]
        %v358 = vld [vmem:[%s269 + $0x10] sm:$0xf]
        %v359 = vld [vmem:[%s269 + $0x14] sm:$0xf]
        %v360 = vld [vmem:[%s269 + $0x18] sm:$0xf]
        %v361 = vld [vmem:[%s269 + $0x1c] sm:$0xf]
        %v362 = vld [vmem:[%s269 + $0x20] sm:$0xf]
        %v363 = vld [vmem:[%s269 + $0x24] sm:$0xf]
        %v364 = vld [vmem:[%s269 + $0x28] sm:$0xf]
        %v365 = vld [vmem:[%s269 + $0x2c] sm:$0xf]
        %v366 = vld [vmem:[%s269 + $0x30] sm:$0xf]
        %v367 = vld [vmem:[%s269 + $0x34] sm:$0xf]
        %v368 = vld [vmem:[%s269 + $0x38] sm:$0xf]
        %v369 = vld [vmem:[%s269 + $0x3c] sm:$0xf]
        %v370 = vld [vmem:[%s269 + $0x40] sm:$0xf]
        %v371 = vld [vmem:[%s269 + $0x44] sm:$0xf]
        %v372 = vld [vmem:[%s269 + $0x48] sm:$0xf]
        %v373 = vld [vmem:[%s269 + $0x4c] sm:$0xf]
        %v374 = vld [vmem:[%s269 + $0x50] sm:$0xf]
        %v375 = vld [vmem:[%s269 + $0x54] sm:$0xf]
        %v376 = vld [vmem:[%s269 + $0x58] sm:$0xf]
        %v377 = vld [vmem:[%s269 + $0x5c] sm:$0xf]
        %v378 = vld [vmem:[%s269 + $0x60] sm:$0xf]
        %v379 = vld [vmem:[%s269 + $0x64] sm:$0xf]
        %v380 = vld [vmem:[%s269 + $0x68] sm:$0xf]
        %v381 = vld [vmem:[%s269 + $0x6c] sm:$0xf]
        %v382 = vld [vmem:[%s269 + $0x70] sm:$0xf]
        %v383 = vld [vmem:[%s269 + $0x74] sm:$0xf]
        %v384 = vld [vmem:[%s269 + $0x78] sm:$0xf]
        %v385 = vld [vmem:[%s269 + $0x7c] sm:$0xf]
        %v386 = vunpack.c.l.bf16 %v354
        %v387 = vunpack.c.l.bf16 %v355
        %v388 = vunpack.c.l.bf16 %v356
        %v389 = vunpack.c.l.bf16 %v357
        %v390 = vunpack.c.l.bf16 %v358
        %v391 = vunpack.c.l.bf16 %v359
        %v392 = vunpack.c.l.bf16 %v360
        %v393 = vunpack.c.l.bf16 %v361
        %v394 = vunpack.c.l.bf16 %v362
        %v395 = vunpack.c.l.bf16 %v363
        %v396 = vunpack.c.l.bf16 %v364
        %v397 = vunpack.c.l.bf16 %v365
        %v398 = vunpack.c.l.bf16 %v366
        %v399 = vunpack.c.l.bf16 %v367
        %v400 = vunpack.c.l.bf16 %v368
        %v401 = vunpack.c.l.bf16 %v369
        %v402 = vunpack.c.l.bf16 %v370
        %v403 = vunpack.c.l.bf16 %v371
        %v404 = vunpack.c.l.bf16 %v372
        %v405 = vunpack.c.l.bf16 %v373
        %v406 = vunpack.c.l.bf16 %v374
        %v407 = vunpack.c.l.bf16 %v375
        %v408 = vunpack.c.l.bf16 %v376
        %v409 = vunpack.c.l.bf16 %v377
        %v410 = vunpack.c.l.bf16 %v378
        %v411 = vunpack.c.l.bf16 %v379
        %v412 = vunpack.c.l.bf16 %v380
        %v413 = vunpack.c.l.bf16 %v381
        %v414 = vunpack.c.l.bf16 %v382
        %v415 = vunpack.c.l.bf16 %v383
        %v416 = vunpack.c.l.bf16 %v384
        %v417 = vunpack.c.l.bf16 %v385
        %s418 = scalar_lea.vmem [#allocation2], 24
        %419 = vst.msk [vmem:[%s418 + $0x1] sm:$0xff] %vm298, %v386
        %420 = vst.msk [vmem:[%s418 + $0x9] sm:$0xff] %vm298, %v387
        %421 = vst.msk [vmem:[%s418 + $0x19] sm:$0xff] %vm298, %v388
        %422 = vst.msk [vmem:[%s418 + $0x21] sm:$0xff] %vm298, %v389
        %423 = vst.msk [vmem:[%s418 + $0x31] sm:$0xff] %vm298, %v390
        %424 = vst.msk [vmem:[%s418 + $0x39] sm:$0xff] %vm298, %v391
        %425 = vst.msk [vmem:[%s418 + $0x49] sm:$0xff] %vm298, %v392
        %426 = vst.msk [vmem:[%s418 + $0x51] sm:$0xff] %vm298, %v393
        %427 = vst.msk [vmem:[%s418 + $0x61] sm:$0xff] %vm298, %v394
        %428 = vst.msk [vmem:[%s418 + $0x69] sm:$0xff] %vm298, %v395
        %429 = vst.msk [vmem:[%s418 + $0x79] sm:$0xff] %vm298, %v396
        %430 = vst.msk [vmem:[%s418 + $0x81] sm:$0xff] %vm298, %v397
        %431 = vst.msk [vmem:[%s418 + $0x91] sm:$0xff] %vm298, %v398
        %432 = vst.msk [vmem:[%s418 + $0x99] sm:$0xff] %vm298, %v399
        %433 = vst.msk [vmem:[%s418 + $0xa9] sm:$0xff] %vm298, %v400
        %434 = vst.msk [vmem:[%s418 + $0xb1] sm:$0xff] %vm298, %v401
        %435 = vst.msk [vmem:[%s418 + $0xc1] sm:$0xff] %vm298, %v402
        %436 = vst.msk [vmem:[%s418 + $0xc9] sm:$0xff] %vm298, %v403
        %437 = vst.msk [vmem:[%s418 + $0xd9] sm:$0xff] %vm298, %v404
        %438 = vst.msk [vmem:[%s418 + $0xe1] sm:$0xff] %vm298, %v405
        %439 = vst.msk [vmem:[%s418 + $0xf1] sm:$0xff] %vm298, %v406
        %440 = vst.msk [vmem:[%s418 + $0xf9] sm:$0xff] %vm298, %v407
        %441 = vst.msk [vmem:[%s418 + $0x109] sm:$0xff] %vm298, %v408
        %442 = vst.msk [vmem:[%s418 + $0x111] sm:$0xff] %vm298, %v409
        %443 = vst.msk [vmem:[%s418 + $0x121] sm:$0xff] %vm298, %v410
        %444 = vst.msk [vmem:[%s418 + $0x129] sm:$0xff] %vm298, %v411
        %445 = vst.msk [vmem:[%s418 + $0x139] sm:$0xff] %vm298, %v412
        %446 = vst.msk [vmem:[%s418 + $0x141] sm:$0xff] %vm298, %v413
        %447 = vst.msk [vmem:[%s418 + $0x151] sm:$0xff] %vm298, %v414
        %448 = vst.msk [vmem:[%s418 + $0x159] sm:$0xff] %vm298, %v415
        %449 = vst.msk [vmem:[%s418 + $0x169] sm:$0xff] %vm298, %v416
        %450 = vst.msk [vmem:[%s418 + $0x171] sm:$0xff] %vm298, %v417
      $region40: #{bottleneck_forward.4} parent=35 // pred_fallthru
        _
      %s451 = smul.u32 %s22, 8
      %s452 = smul.u32 %s451, 24
      %s453 = scalar_lea.vmem [#allocation2], %s452
      %v454 = vld [vmem:[%s453] sm:$0xff]
      %v455 = vld [vmem:[%s453 + $0x8] sm:$0xff]
      %v456 = vld [vmem:[%s453 + $0x18] sm:$0xff]
      %v457 = vld [vmem:[%s453 + $0x20] sm:$0xff]
      %v458 = vld [vmem:[%s453 + $0x30] sm:$0xff]
      %v459 = vld [vmem:[%s453 + $0x38] sm:$0xff]
      %v460 = vld [vmem:[%s453 + $0x48] sm:$0xff]
      %v461 = vld [vmem:[%s453 + $0x50] sm:$0xff]
      %v462 = vld [vmem:[%s453 + $0x60] sm:$0xff]
      %v463 = vld [vmem:[%s453 + $0x68] sm:$0xff]
      %v464 = vld [vmem:[%s453 + $0x78] sm:$0xff]
      %v465 = vld [vmem:[%s453 + $0x80] sm:$0xff]
      %v466 = vld [vmem:[%s453 + $0x90] sm:$0xff]
      %v467 = vld [vmem:[%s453 + $0x98] sm:$0xff]
      %v468 = vld [vmem:[%s453 + $0xa8] sm:$0xff]
      %v469 = vld [vmem:[%s453 + $0xb0] sm:$0xff]
      %v470 = vld [vmem:[%s273] sm:$0x1]
      %v471 = vlaneseq
      %v472 = vshrl.u32 %v471, 7
      %v473 = vsub.s32 0, %v472
      %v474 = vrot.slane %v470, %v473
      %v475 = vmul.f32 %v454, %v474
      %v476 = vmul.f32 %v455, %v474
      %v477 = vmul.f32 %v456, %v474
      %v478 = vmul.f32 %v457, %v474
      %v479 = vmul.f32 %v458, %v474
      %v480 = vmul.f32 %v459, %v474
      %v481 = vmul.f32 %v460, %v474
      %v482 = vmul.f32 %v461, %v474
      %v483 = vmul.f32 %v462, %v474
      %v484 = vmul.f32 %v463, %v474
      %v485 = vmul.f32 %v464, %v474
      %v486 = vmul.f32 %v465, %v474
      %v487 = vmul.f32 %v466, %v474
      %v488 = vmul.f32 %v467, %v474
      %v489 = vmul.f32 %v468, %v474
      %v490 = vmul.f32 %v469, %v474
      %v491 = vadd.f32 %v475, 0.0
      %v492 = vadd.f32 %v476, 0.0
      %v493 = vadd.f32 %v477, 0.0
      %v494 = vadd.f32 %v478, 0.0
      %v495 = vadd.f32 %v479, 0.0
      %v496 = vadd.f32 %v480, 0.0
      %v497 = vadd.f32 %v481, 0.0
      %v498 = vadd.f32 %v482, 0.0
      %v499 = vadd.f32 %v483, 0.0
      %v500 = vadd.f32 %v484, 0.0
      %v501 = vadd.f32 %v485, 0.0
      %v502 = vadd.f32 %v486, 0.0
      %v503 = vadd.f32 %v487, 0.0
      %v504 = vadd.f32 %v488, 0.0
      %v505 = vadd.f32 %v489, 0.0
      %v506 = vadd.f32 %v490, 0.0
      %v507 = vld [vmem:[%s453 + $0x1] sm:$0xff]
      %v508 = vld [vmem:[%s453 + $0x9] sm:$0xff]
      %v509 = vld [vmem:[%s453 + $0x19] sm:$0xff]
      %v510 = vld [vmem:[%s453 + $0x21] sm:$0xff]
      %v511 = vld [vmem:[%s453 + $0x31] sm:$0xff]
      %v512 = vld [vmem:[%s453 + $0x39] sm:$0xff]
      %v513 = vld [vmem:[%s453 + $0x49] sm:$0xff]
      %v514 = vld [vmem:[%s453 + $0x51] sm:$0xff]
      %v515 = vld [vmem:[%s453 + $0x61] sm:$0xff]
      %v516 = vld [vmem:[%s453 + $0x69] sm:$0xff]
      %v517 = vld [vmem:[%s453 + $0x79] sm:$0xff]
      %v518 = vld [vmem:[%s453 + $0x81] sm:$0xff]
      %v519 = vld [vmem:[%s453 + $0x91] sm:$0xff]
      %v520 = vld [vmem:[%s453 + $0x99] sm:$0xff]
      %v521 = vld [vmem:[%s453 + $0xa9] sm:$0xff]
      %v522 = vld [vmem:[%s453 + $0xb1] sm:$0xff]
      %v523 = vld [vmem:[%s273 + $0x1] sm:$0x1]
      %v524 = vlaneseq
      %v525 = vshrl.u32 %v524, 7
      %v526 = vsub.s32 0, %v525
      %v527 = vrot.slane %v523, %v526
      %v528 = vmul.f32 %v507, %v527
      %v529 = vmul.f32 %v508, %v527
      %v530 = vmul.f32 %v509, %v527
      %v531 = vmul.f32 %v510, %v527
      %v532 = vmul.f32 %v511, %v527
      %v533 = vmul.f32 %v512, %v527
      %v534 = vmul.f32 %v513, %v527
      %v535 = vmul.f32 %v514, %v527
      %v536 = vmul.f32 %v515, %v527
      %v537 = vmul.f32 %v516, %v527
      %v538 = vmul.f32 %v517, %v527
      %v539 = vmul.f32 %v518, %v527
      %v540 = vmul.f32 %v519, %v527
      %v541 = vmul.f32 %v520, %v527
      %v542 = vmul.f32 %v521, %v527
      %v543 = vmul.f32 %v522, %v527
      %v544 = vadd.f32 %v491, %v528
      %v545 = vadd.f32 %v492, %v529
      %v546 = vadd.f32 %v493, %v530
      %v547 = vadd.f32 %v494, %v531
      %v548 = vadd.f32 %v495, %v532
      %v549 = vadd.f32 %v496, %v533
      %v550 = vadd.f32 %v497, %v534
      %v551 = vadd.f32 %v498, %v535
      %v552 = vadd.f32 %v499, %v536
      %v553 = vadd.f32 %v500, %v537
      %v554 = vadd.f32 %v501, %v538
      %v555 = vadd.f32 %v502, %v539
      %v556 = vadd.f32 %v503, %v540
      %v557 = vadd.f32 %v504, %v541
      %v558 = vadd.f32 %v505, %v542
      %v559 = vadd.f32 %v506, %v543
      %v560 = vld [vmem:[%s453 + $0x2] sm:$0xff]
      %v561 = vld [vmem:[%s453 + $0xa] sm:$0xff]
      %v562 = vld [vmem:[%s453 + $0x1a] sm:$0xff]
      %v563 = vld [vmem:[%s453 + $0x22] sm:$0xff]
      %v564 = vld [vmem:[%s453 + $0x32] sm:$0xff]
      %v565 = vld [vmem:[%s453 + $0x3a] sm:$0xff]
      %v566 = vld [vmem:[%s453 + $0x4a] sm:$0xff]
      %v567 = vld [vmem:[%s453 + $0x52] sm:$0xff]
      %v568 = vld [vmem:[%s453 + $0x62] sm:$0xff]
      %v569 = vld [vmem:[%s453 + $0x6a] sm:$0xff]
      %v570 = vld [vmem:[%s453 + $0x7a] sm:$0xff]
      %v571 = vld [vmem:[%s453 + $0x82] sm:$0xff]
      %v572 = vld [vmem:[%s453 + $0x92] sm:$0xff]
      %v573 = vld [vmem:[%s453 + $0x9a] sm:$0xff]
      %v574 = vld [vmem:[%s453 + $0xaa] sm:$0xff]
      %v575 = vld [vmem:[%s453 + $0xb2] sm:$0xff]
      %v576 = vld [vmem:[%s273 + $0x2] sm:$0x1]
      %v577 = vlaneseq
      %v578 = vshrl.u32 %v577, 7
      %v579 = vsub.s32 0, %v578
      %v580 = vrot.slane %v576, %v579
      %v581 = vmul.f32 %v560, %v580
      %v582 = vmul.f32 %v561, %v580
      %v583 = vmul.f32 %v562, %v580
      %v584 = vmul.f32 %v563, %v580
      %v585 = vmul.f32 %v564, %v580
      %v586 = vmul.f32 %v565, %v580
      %v587 = vmul.f32 %v566, %v580
      %v588 = vmul.f32 %v567, %v580
      %v589 = vmul.f32 %v568, %v580
      %v590 = vmul.f32 %v569, %v580
      %v591 = vmul.f32 %v570, %v580
      %v592 = vmul.f32 %v571, %v580
      %v593 = vmul.f32 %v572, %v580
      %v594 = vmul.f32 %v573, %v580
      %v595 = vmul.f32 %v574, %v580
      %v596 = vmul.f32 %v575, %v580
      %v597 = vadd.f32 %v544, %v581
      %v598 = vadd.f32 %v545, %v582
      %v599 = vadd.f32 %v546, %v583
      %v600 = vadd.f32 %v547, %v584
      %v601 = vadd.f32 %v548, %v585
      %v602 = vadd.f32 %v549, %v586
      %v603 = vadd.f32 %v550, %v587
      %v604 = vadd.f32 %v551, %v588
      %v605 = vadd.f32 %v552, %v589
      %v606 = vadd.f32 %v553, %v590
      %v607 = vadd.f32 %v554, %v591
      %v608 = vadd.f32 %v555, %v592
      %v609 = vadd.f32 %v556, %v593
      %v610 = vadd.f32 %v557, %v594
      %v611 = vadd.f32 %v558, %v595
      %v612 = vadd.f32 %v559, %v596
      %s613 = sadd.s32 %s451, 1
      %s614 = smul.u32 %s613, 24
      %s615 = scalar_lea.vmem [#allocation2], %s614
      %v616 = vld [vmem:[%s615] sm:$0xff]
      %v617 = vld [vmem:[%s615 + $0x8] sm:$0xff]
      %v618 = vld [vmem:[%s615 + $0x18] sm:$0xff]
      %v619 = vld [vmem:[%s615 + $0x20] sm:$0xff]
      %v620 = vld [vmem:[%s615 + $0x30] sm:$0xff]
      %v621 = vld [vmem:[%s615 + $0x38] sm:$0xff]
      %v622 = vld [vmem:[%s615 + $0x48] sm:$0xff]
      %v623 = vld [vmem:[%s615 + $0x50] sm:$0xff]
      %v624 = vld [vmem:[%s615 + $0x60] sm:$0xff]
      %v625 = vld [vmem:[%s615 + $0x68] sm:$0xff]
      %v626 = vld [vmem:[%s615 + $0x78] sm:$0xff]
      %v627 = vld [vmem:[%s615 + $0x80] sm:$0xff]
      %v628 = vld [vmem:[%s615 + $0x90] sm:$0xff]
      %v629 = vld [vmem:[%s615 + $0x98] sm:$0xff]
      %v630 = vld [vmem:[%s615 + $0xa8] sm:$0xff]
      %v631 = vld [vmem:[%s615 + $0xb0] sm:$0xff]
      %s632 = scalar_lea.vmem %s273, 4
      %v633 = vld [vmem:[%s632] sm:$0x1]
      %v634 = vlaneseq
      %v635 = vshrl.u32 %v634, 7
      %v636 = vsub.s32 0, %v635
      %v637 = vrot.slane %v633, %v636
      %v638 = vmul.f32 %v616, %v637
      %v639 = vmul.f32 %v617, %v637
      %v640 = vmul.f32 %v618, %v637
      %v641 = vmul.f32 %v619, %v637
      %v642 = vmul.f32 %v620, %v637
      %v643 = vmul.f32 %v621, %v637
      %v644 = vmul.f32 %v622, %v637
      %v645 = vmul.f32 %v623, %v637
      %v646 = vmul.f32 %v624, %v637
      %v647 = vmul.f32 %v625, %v637
      %v648 = vmul.f32 %v626, %v637
      %v649 = vmul.f32 %v627, %v637
      %v650 = vmul.f32 %v628, %v637
      %v651 = vmul.f32 %v629, %v637
      %v652 = vmul.f32 %v630, %v637
      %v653 = vmul.f32 %v631, %v637
      %v654 = vadd.f32 %v597, %v638
      %v655 = vadd.f32 %v598, %v639
      %v656 = vadd.f32 %v599, %v640
      %v657 = vadd.f32 %v600, %v641
      %v658 = vadd.f32 %v601, %v642
      %v659 = vadd.f32 %v602, %v643
      %v660 = vadd.f32 %v603, %v644
      %v661 = vadd.f32 %v604, %v645
      %v662 = vadd.f32 %v605, %v646
      %v663 = vadd.f32 %v606, %v647
      %v664 = vadd.f32 %v607, %v648
      %v665 = vadd.f32 %v608, %v649
      %v666 = vadd.f32 %v609, %v650
      %v667 = vadd.f32 %v610, %v651
      %v668 = vadd.f32 %v611, %v652
      %v669 = vadd.f32 %v612, %v653
      %v670 = vld [vmem:[%s615 + $0x1] sm:$0xff]
      %v671 = vld [vmem:[%s615 + $0x9] sm:$0xff]
      %v672 = vld [vmem:[%s615 + $0x19] sm:$0xff]
      %v673 = vld [vmem:[%s615 + $0x21] sm:$0xff]
      %v674 = vld [vmem:[%s615 + $0x31] sm:$0xff]
      %v675 = vld [vmem:[%s615 + $0x39] sm:$0xff]
      %v676 = vld [vmem:[%s615 + $0x49] sm:$0xff]
      %v677 = vld [vmem:[%s615 + $0x51] sm:$0xff]
      %v678 = vld [vmem:[%s615 + $0x61] sm:$0xff]
      %v679 = vld [vmem:[%s615 + $0x69] sm:$0xff]
      %v680 = vld [vmem:[%s615 + $0x79] sm:$0xff]
      %v681 = vld [vmem:[%s615 + $0x81] sm:$0xff]
      %v682 = vld [vmem:[%s615 + $0x91] sm:$0xff]
      %v683 = vld [vmem:[%s615 + $0x99] sm:$0xff]
      %v684 = vld [vmem:[%s615 + $0xa9] sm:$0xff]
      %v685 = vld [vmem:[%s615 + $0xb1] sm:$0xff]
      %v686 = vld [vmem:[%s632 + $0x1] sm:$0x1]
      %v687 = vlaneseq
      %v688 = vshrl.u32 %v687, 7
      %v689 = vsub.s32 0, %v688
      %v690 = vrot.slane %v686, %v689
      %v691 = vmul.f32 %v670, %v690
      %v692 = vmul.f32 %v671, %v690
      %v693 = vmul.f32 %v672, %v690
      %v694 = vmul.f32 %v673, %v690
      %v695 = vmul.f32 %v674, %v690
      %v696 = vmul.f32 %v675, %v690
      %v697 = vmul.f32 %v676, %v690
      %v698 = vmul.f32 %v677, %v690
      %v699 = vmul.f32 %v678, %v690
      %v700 = vmul.f32 %v679, %v690
      %v701 = vmul.f32 %v680, %v690
      %v702 = vmul.f32 %v681, %v690
      %v703 = vmul.f32 %v682, %v690
      %v704 = vmul.f32 %v683, %v690
      %v705 = vmul.f32 %v684, %v690
      %v706 = vmul.f32 %v685, %v690
      %v707 = vadd.f32 %v654, %v691
      %v708 = vadd.f32 %v655, %v692
      %v709 = vadd.f32 %v656, %v693
      %v710 = vadd.f32 %v657, %v694
      %v711 = vadd.f32 %v658, %v695
      %v712 = vadd.f32 %v659, %v696
      %v713 = vadd.f32 %v660, %v697
      %v714 = vadd.f32 %v661, %v698
      %v715 = vadd.f32 %v662, %v699
      %v716 = vadd.f32 %v663, %v700
      %v717 = vadd.f32 %v664, %v701
      %v718 = vadd.f32 %v665, %v702
      %v719 = vadd.f32 %v666, %v703
      %v720 = vadd.f32 %v667, %v704
      %v721 = vadd.f32 %v668, %v705
      %v722 = vadd.f32 %v669, %v706
      %v723 = vld [vmem:[%s615 + $0x2] sm:$0xff]
      %v724 = vld [vmem:[%s615 + $0xa] sm:$0xff]
      %v725 = vld [vmem:[%s615 + $0x1a] sm:$0xff]
      %v726 = vld [vmem:[%s615 + $0x22] sm:$0xff]
      %v727 = vld [vmem:[%s615 + $0x32] sm:$0xff]
      %v728 = vld [vmem:[%s615 + $0x3a] sm:$0xff]
      %v729 = vld [vmem:[%s615 + $0x4a] sm:$0xff]
      %v730 = vld [vmem:[%s615 + $0x52] sm:$0xff]
      %v731 = vld [vmem:[%s615 + $0x62] sm:$0xff]
      %v732 = vld [vmem:[%s615 + $0x6a] sm:$0xff]
      %v733 = vld [vmem:[%s615 + $0x7a] sm:$0xff]
      %v734 = vld [vmem:[%s615 + $0x82] sm:$0xff]
      %v735 = vld [vmem:[%s615 + $0x92] sm:$0xff]
      %v736 = vld [vmem:[%s615 + $0x9a] sm:$0xff]
      %v737 = vld [vmem:[%s615 + $0xaa] sm:$0xff]
      %v738 = vld [vmem:[%s615 + $0xb2] sm:$0xff]
      %v739 = vld [vmem:[%s632 + $0x2] sm:$0x1]
      %v740 = vlaneseq
      %v741 = vshrl.u32 %v740, 7
      %v742 = vsub.s32 0, %v741
      %v743 = vrot.slane %v739, %v742
      %v744 = vmul.f32 %v723, %v743
      %v745 = vmul.f32 %v724, %v743
      %v746 = vmul.f32 %v725, %v743
      %v747 = vmul.f32 %v726, %v743
      %v748 = vmul.f32 %v727, %v743
      %v749 = vmul.f32 %v728, %v743
      %v750 = vmul.f32 %v729, %v743
      %v751 = vmul.f32 %v730, %v743
      %v752 = vmul.f32 %v731, %v743
      %v753 = vmul.f32 %v732, %v743
      %v754 = vmul.f32 %v733, %v743
      %v755 = vmul.f32 %v734, %v743
      %v756 = vmul.f32 %v735, %v743
      %v757 = vmul.f32 %v736, %v743
      %v758 = vmul.f32 %v737, %v743
      %v759 = vmul.f32 %v738, %v743
      %v760 = vadd.f32 %v707, %v744
      %v761 = vadd.f32 %v708, %v745
      %v762 = vadd.f32 %v709, %v746
      %v763 = vadd.f32 %v710, %v747
      %v764 = vadd.f32 %v711, %v748
      %v765 = vadd.f32 %v712, %v749
      %v766 = vadd.f32 %v713, %v750
      %v767 = vadd.f32 %v714, %v751
      %v768 = vadd.f32 %v715, %v752
      %v769 = vadd.f32 %v716, %v753
      %v770 = vadd.f32 %v717, %v754
      %v771 = vadd.f32 %v718, %v755
      %v772 = vadd.f32 %v719, %v756
      %v773 = vadd.f32 %v720, %v757
      %v774 = vadd.f32 %v721, %v758
      %v775 = vadd.f32 %v722, %v759
      %s776 = sadd.s32 %s451, 2
      %s777 = smul.u32 %s776, 24
      %s778 = scalar_lea.vmem [#allocation2], %s777
      %v779 = vld [vmem:[%s778] sm:$0xff]
      %v780 = vld [vmem:[%s778 + $0x8] sm:$0xff]
      %v781 = vld [vmem:[%s778 + $0x18] sm:$0xff]
      %v782 = vld [vmem:[%s778 + $0x20] sm:$0xff]
      %v783 = vld [vmem:[%s778 + $0x30] sm:$0xff]
      %v784 = vld [vmem:[%s778 + $0x38] sm:$0xff]
      %v785 = vld [vmem:[%s778 + $0x48] sm:$0xff]
      %v786 = vld [vmem:[%s778 + $0x50] sm:$0xff]
      %v787 = vld [vmem:[%s778 + $0x60] sm:$0xff]
      %v788 = vld [vmem:[%s778 + $0x68] sm:$0xff]
      %v789 = vld [vmem:[%s778 + $0x78] sm:$0xff]
      %v790 = vld [vmem:[%s778 + $0x80] sm:$0xff]
      %v791 = vld [vmem:[%s778 + $0x90] sm:$0xff]
      %v792 = vld [vmem:[%s778 + $0x98] sm:$0xff]
      %v793 = vld [vmem:[%s778 + $0xa8] sm:$0xff]
      %v794 = vld [vmem:[%s778 + $0xb0] sm:$0xff]
      %s795 = scalar_lea.vmem %s273, 8
      %v796 = vld [vmem:[%s795] sm:$0x1]
      %v797 = vlaneseq
      %v798 = vshrl.u32 %v797, 7
      %v799 = vsub.s32 0, %v798
      %v800 = vrot.slane %v796, %v799
      %v801 = vmul.f32 %v779, %v800
      %v802 = vmul.f32 %v780, %v800
      %v803 = vmul.f32 %v781, %v800
      %v804 = vmul.f32 %v782, %v800
      %v805 = vmul.f32 %v783, %v800
      %v806 = vmul.f32 %v784, %v800
      %v807 = vmul.f32 %v785, %v800
      %v808 = vmul.f32 %v786, %v800
      %v809 = vmul.f32 %v787, %v800
      %v810 = vmul.f32 %v788, %v800
      %v811 = vmul.f32 %v789, %v800
      %v812 = vmul.f32 %v790, %v800
      %v813 = vmul.f32 %v791, %v800
      %v814 = vmul.f32 %v792, %v800
      %v815 = vmul.f32 %v793, %v800
      %v816 = vmul.f32 %v794, %v800
      %v817 = vadd.f32 %v760, %v801
      %v818 = vadd.f32 %v761, %v802
      %v819 = vadd.f32 %v762, %v803
      %v820 = vadd.f32 %v763, %v804
      %v821 = vadd.f32 %v764, %v805
      %v822 = vadd.f32 %v765, %v806
      %v823 = vadd.f32 %v766, %v807
      %v824 = vadd.f32 %v767, %v808
      %v825 = vadd.f32 %v768, %v809
      %v826 = vadd.f32 %v769, %v810
      %v827 = vadd.f32 %v770, %v811
      %v828 = vadd.f32 %v771, %v812
      %v829 = vadd.f32 %v772, %v813
      %v830 = vadd.f32 %v773, %v814
      %v831 = vadd.f32 %v774, %v815
      %v832 = vadd.f32 %v775, %v816
      %v833 = vld [vmem:[%s778 + $0x1] sm:$0xff]
      %v834 = vld [vmem:[%s778 + $0x9] sm:$0xff]
      %v835 = vld [vmem:[%s778 + $0x19] sm:$0xff]
      %v836 = vld [vmem:[%s778 + $0x21] sm:$0xff]
      %v837 = vld [vmem:[%s778 + $0x31] sm:$0xff]
      %v838 = vld [vmem:[%s778 + $0x39] sm:$0xff]
      %v839 = vld [vmem:[%s778 + $0x49] sm:$0xff]
      %v840 = vld [vmem:[%s778 + $0x51] sm:$0xff]
      %v841 = vld [vmem:[%s778 + $0x61] sm:$0xff]
      %v842 = vld [vmem:[%s778 + $0x69] sm:$0xff]
      %v843 = vld [vmem:[%s778 + $0x79] sm:$0xff]
      %v844 = vld [vmem:[%s778 + $0x81] sm:$0xff]
      %v845 = vld [vmem:[%s778 + $0x91] sm:$0xff]
      %v846 = vld [vmem:[%s778 + $0x99] sm:$0xff]
      %v847 = vld [vmem:[%s778 + $0xa9] sm:$0xff]
      %v848 = vld [vmem:[%s778 + $0xb1] sm:$0xff]
      %v849 = vld [vmem:[%s795 + $0x1] sm:$0x1]
      %v850 = vlaneseq
      %v851 = vshrl.u32 %v850, 7
      %v852 = vsub.s32 0, %v851
      %v853 = vrot.slane %v849, %v852
      %v854 = vmul.f32 %v833, %v853
      %v855 = vmul.f32 %v834, %v853
      %v856 = vmul.f32 %v835, %v853
      %v857 = vmul.f32 %v836, %v853
      %v858 = vmul.f32 %v837, %v853
      %v859 = vmul.f32 %v838, %v853
      %v860 = vmul.f32 %v839, %v853
      %v861 = vmul.f32 %v840, %v853
      %v862 = vmul.f32 %v841, %v853
      %v863 = vmul.f32 %v842, %v853
      %v864 = vmul.f32 %v843, %v853
      %v865 = vmul.f32 %v844, %v853
      %v866 = vmul.f32 %v845, %v853
      %v867 = vmul.f32 %v846, %v853
      %v868 = vmul.f32 %v847, %v853
      %v869 = vmul.f32 %v848, %v853
      %v870 = vadd.f32 %v817, %v854
      %v871 = vadd.f32 %v818, %v855
      %v872 = vadd.f32 %v819, %v856
      %v873 = vadd.f32 %v820, %v857
      %v874 = vadd.f32 %v821, %v858
      %v875 = vadd.f32 %v822, %v859
      %v876 = vadd.f32 %v823, %v860
      %v877 = vadd.f32 %v824, %v861
      %v878 = vadd.f32 %v825, %v862
      %v879 = vadd.f32 %v826, %v863
      %v880 = vadd.f32 %v827, %v864
      %v881 = vadd.f32 %v828, %v865
      %v882 = vadd.f32 %v829, %v866
      %v883 = vadd.f32 %v830, %v867
      %v884 = vadd.f32 %v831, %v868
      %v885 = vadd.f32 %v832, %v869
      %v886 = vld [vmem:[%s778 + $0x2] sm:$0xff]
      %v887 = vld [vmem:[%s778 + $0xa] sm:$0xff]
      %v888 = vld [vmem:[%s778 + $0x1a] sm:$0xff]
      %v889 = vld [vmem:[%s778 + $0x22] sm:$0xff]
      %v890 = vld [vmem:[%s778 + $0x32] sm:$0xff]
      %v891 = vld [vmem:[%s778 + $0x3a] sm:$0xff]
      %v892 = vld [vmem:[%s778 + $0x4a] sm:$0xff]
      %v893 = vld [vmem:[%s778 + $0x52] sm:$0xff]
      %v894 = vld [vmem:[%s778 + $0x62] sm:$0xff]
      %v895 = vld [vmem:[%s778 + $0x6a] sm:$0xff]
      %v896 = vld [vmem:[%s778 + $0x7a] sm:$0xff]
      %v897 = vld [vmem:[%s778 + $0x82] sm:$0xff]
      %v898 = vld [vmem:[%s778 + $0x92] sm:$0xff]
      %v899 = vld [vmem:[%s778 + $0x9a] sm:$0xff]
      %v900 = vld [vmem:[%s778 + $0xaa] sm:$0xff]
      %v901 = vld [vmem:[%s778 + $0xb2] sm:$0xff]
      %v902 = vld [vmem:[%s795 + $0x2] sm:$0x1]
      %v903 = vlaneseq
      %v904 = vshrl.u32 %v903, 7
      %v905 = vsub.s32 0, %v904
      %v906 = vrot.slane %v902, %v905
      %v907 = vmul.f32 %v886, %v906
      %v908 = vmul.f32 %v887, %v906
      %v909 = vmul.f32 %v888, %v906
      %v910 = vmul.f32 %v889, %v906
      %v911 = vmul.f32 %v890, %v906
      %v912 = vmul.f32 %v891, %v906
      %v913 = vmul.f32 %v892, %v906
      %v914 = vmul.f32 %v893, %v906
      %v915 = vmul.f32 %v894, %v906
      %v916 = vmul.f32 %v895, %v906
      %v917 = vmul.f32 %v896, %v906
      %v918 = vmul.f32 %v897, %v906
      %v919 = vmul.f32 %v898, %v906
      %v920 = vmul.f32 %v899, %v906
      %v921 = vmul.f32 %v900, %v906
      %v922 = vmul.f32 %v901, %v906
      %v923 = vadd.f32 %v870, %v907
      %v924 = vadd.f32 %v871, %v908
      %v925 = vadd.f32 %v872, %v909
      %v926 = vadd.f32 %v873, %v910
      %v927 = vadd.f32 %v874, %v911
      %v928 = vadd.f32 %v875, %v912
      %v929 = vadd.f32 %v876, %v913
      %v930 = vadd.f32 %v877, %v914
      %v931 = vadd.f32 %v878, %v915
      %v932 = vadd.f32 %v879, %v916
      %v933 = vadd.f32 %v880, %v917
      %v934 = vadd.f32 %v881, %v918
      %v935 = vadd.f32 %v882, %v919
      %v936 = vadd.f32 %v883, %v920
      %v937 = vadd.f32 %v884, %v921
      %v938 = vadd.f32 %v885, %v922
      %v939 = vld [vmem:[%s276] sm:$0x1]
      %v941 = vlaneseq
      %v942 = vshrl.u32 %v941, 7
      %v943 = vsub.s32 0, %v942
      %v944 = vrot.slane %v939, %v943
      %v946 = vadd.f32 %v923, %v944
      %v947 = vadd.f32 %v924, %v944
      %v948 = vadd.f32 %v925, %v944
      %v949 = vadd.f32 %v926, %v944
      %v950 = vadd.f32 %v927, %v944
      %v951 = vadd.f32 %v928, %v944
      %v952 = vadd.f32 %v929, %v944
      %v953 = vadd.f32 %v930, %v944
      %v954 = vadd.f32 %v931, %v944
      %v955 = vadd.f32 %v932, %v944
      %v956 = vadd.f32 %v933, %v944
      %v957 = vadd.f32 %v934, %v944
      %v958 = vadd.f32 %v935, %v944
      %v959 = vadd.f32 %v936, %v944
      %v960 = vadd.f32 %v937, %v944
      %v961 = vadd.f32 %v938, %v944
      %vm962 = vcmp.gt.f32.partialorder %v946, 0.0
      %vm963 = vcmp.gt.f32.partialorder %v947, 0.0
      %vm964 = vcmp.gt.f32.partialorder %v948, 0.0
      %vm965 = vcmp.gt.f32.partialorder %v949, 0.0
      %vm966 = vcmp.gt.f32.partialorder %v950, 0.0
      %vm967 = vcmp.gt.f32.partialorder %v951, 0.0
      %vm968 = vcmp.gt.f32.partialorder %v952, 0.0
      %vm969 = vcmp.gt.f32.partialorder %v953, 0.0
      %vm970 = vcmp.gt.f32.partialorder %v954, 0.0
      %vm971 = vcmp.gt.f32.partialorder %v955, 0.0
      %vm972 = vcmp.gt.f32.partialorder %v956, 0.0
      %vm973 = vcmp.gt.f32.partialorder %v957, 0.0
      %vm974 = vcmp.gt.f32.partialorder %v958, 0.0
      %vm975 = vcmp.gt.f32.partialorder %v959, 0.0
      %vm976 = vcmp.gt.f32.partialorder %v960, 0.0
      %vm977 = vcmp.gt.f32.partialorder %v961, 0.0
      %v978 = vld [vmem:[%s279] sm:$0x1]
      %v980 = vlaneseq
      %v981 = vshrl.u32 %v980, 7
      %v982 = vsub.s32 0, %v981
      %v983 = vrot.slane %v978, %v982
      %v985 = vmul.f32 %v946, %v983
      %v986 = vmul.f32 %v947, %v983
      %v987 = vmul.f32 %v948, %v983
      %v988 = vmul.f32 %v949, %v983
      %v989 = vmul.f32 %v950, %v983
      %v990 = vmul.f32 %v951, %v983
      %v991 = vmul.f32 %v952, %v983
      %v992 = vmul.f32 %v953, %v983
      %v993 = vmul.f32 %v954, %v983
      %v994 = vmul.f32 %v955, %v983
      %v995 = vmul.f32 %v956, %v983
      %v996 = vmul.f32 %v957, %v983
      %v997 = vmul.f32 %v958, %v983
      %v998 = vmul.f32 %v959, %v983
      %v999 = vmul.f32 %v960, %v983
      %v1000 = vmul.f32 %v961, %v983
      %v1001 = vsel %vm962, %v946, %v985
      %v1002 = vsel %vm963, %v947, %v986
      %v1003 = vsel %vm964, %v948, %v987
      %v1004 = vsel %vm965, %v949, %v988
      %v1005 = vsel %vm966, %v950, %v989
      %v1006 = vsel %vm967, %v951, %v990
      %v1007 = vsel %vm968, %v952, %v991
      %v1008 = vsel %vm969, %v953, %v992
      %v1009 = vsel %vm970, %v954, %v993
      %v1010 = vsel %vm971, %v955, %v994
      %v1011 = vsel %vm972, %v956, %v995
      %v1012 = vsel %vm973, %v957, %v996
      %v1013 = vsel %vm974, %v958, %v997
      %v1014 = vsel %vm975, %v959, %v998
      %v1015 = vsel %vm976, %v960, %v999
      %v1016 = vsel %vm977, %v961, %v1000
      %v1017 = vpack.c.bf16 %v1002, %v1001
      %v1018 = vpack.c.bf16 %v1004, %v1003
      %v1019 = vpack.c.bf16 %v1006, %v1005
      %v1020 = vpack.c.bf16 %v1008, %v1007
      %v1021 = vpack.c.bf16 %v1010, %v1009
      %v1022 = vpack.c.bf16 %v1012, %v1011
      %v1023 = vpack.c.bf16 %v1014, %v1013
      %v1024 = vpack.c.bf16 %v1016, %v1015
      %v1033 = vunpack.c.l.b16 %v1017
      %v1034 = vunpack.c.h.b16 %v1017
      %v1035 = vunpack.c.l.b16 %v1018
      %v1036 = vunpack.c.h.b16 %v1018
      %v1037 = vunpack.c.l.b16 %v1019
      %v1038 = vunpack.c.h.b16 %v1019
      %v1039 = vunpack.c.l.b16 %v1020
      %v1040 = vunpack.c.h.b16 %v1020
      %v1041 = vunpack.c.l.b16 %v1021
      %v1042 = vunpack.c.h.b16 %v1021
      %v1043 = vunpack.c.l.b16 %v1022
      %v1044 = vunpack.c.h.b16 %v1022
      %v1045 = vunpack.c.l.b16 %v1023
      %v1046 = vunpack.c.h.b16 %v1023
      %v1047 = vunpack.c.l.b16 %v1024
      %v1048 = vunpack.c.h.b16 %v1024
      %v1049 = vpack.c.b16 %v1033, %v1033
      %v1050 = vpack.c.b16 %v1034, %v1034
      %v1051 = vpack.c.b16 %v1035, %v1035
      %v1052 = vpack.c.b16 %v1036, %v1036
      %v1053 = vpack.c.b16 %v1037, %v1037
      %v1054 = vpack.c.b16 %v1038, %v1038
      %v1055 = vpack.c.b16 %v1039, %v1039
      %v1056 = vpack.c.b16 %v1040, %v1040
      %v1057 = vpack.c.b16 %v1041, %v1041
      %v1058 = vpack.c.b16 %v1042, %v1042
      %v1059 = vpack.c.b16 %v1043, %v1043
      %v1060 = vpack.c.b16 %v1044, %v1044
      %v1061 = vpack.c.b16 %v1045, %v1045
      %v1062 = vpack.c.b16 %v1046, %v1046
      %v1063 = vpack.c.b16 %v1047, %v1047
      %v1064 = vpack.c.b16 %v1048, %v1048
      %vm1081 = vcmask 519168
      %1082 = vst.msk [vmem:[%s292] sm:$0xf] %vm1081, %v1049
      %1083 = vst.msk [vmem:[%s292 + $0x4] sm:$0xf] %vm1081, %v1050
      %1084 = vst.msk [vmem:[%s292 + $0x8] sm:$0xf] %vm1081, %v1051
      %1085 = vst.msk [vmem:[%s292 + $0xc] sm:$0xf] %vm1081, %v1052
      %1086 = vst.msk [vmem:[%s292 + $0x10] sm:$0xf] %vm1081, %v1053
      %1087 = vst.msk [vmem:[%s292 + $0x14] sm:$0xf] %vm1081, %v1054
      %1088 = vst.msk [vmem:[%s292 + $0x18] sm:$0xf] %vm1081, %v1055
      %1089 = vst.msk [vmem:[%s292 + $0x1c] sm:$0xf] %vm1081, %v1056
      %1090 = vst.msk [vmem:[%s292 + $0x20] sm:$0xf] %vm1081, %v1057
      %1091 = vst.msk [vmem:[%s292 + $0x24] sm:$0xf] %vm1081, %v1058
      %1092 = vst.msk [vmem:[%s292 + $0x28] sm:$0xf] %vm1081, %v1059
      %1093 = vst.msk [vmem:[%s292 + $0x2c] sm:$0xf] %vm1081, %v1060
      %1094 = vst.msk [vmem:[%s292 + $0x30] sm:$0xf] %vm1081, %v1061
      %1095 = vst.msk [vmem:[%s292 + $0x34] sm:$0xf] %vm1081, %v1062
      %1096 = vst.msk [vmem:[%s292 + $0x38] sm:$0xf] %vm1081, %v1063
      %1097 = vst.msk [vmem:[%s292 + $0x3c] sm:$0xf] %vm1081, %v1064
      %s1098 = smul.u32 8, %s22
      %p1099 = scmp.lt.s32.totalorder %s20, 1
      %s1100 = scalar_select %p1099, %s20, 1
      %p1101 = scmp.lt.s32.totalorder %s1098, 15
      %s1102 = scalar_select %p1101, %s1098, 15
      %p1103 = scmp.lt.s32.totalorder %s21, 0
      %s1104 = scalar_select %p1103, %s21, 0
      %s1105 = smul.addr %s1102, 2
      %s1106 = sadd.s32 %s1104, %s1105
      %s1107 = smul.addr %s1100, 32
      %s1108 = sadd.s32 %s1106, %s1107
      %s1109 = smul.addr %s1108, 4
      %s1110 = scalar_lea.vmem %s4, %s1109
      // Predicated region
      $region41: #{bottleneck_forward.4} parent=35 // pred_check
        %p1111 = pneg %p162
      $region42: #{bottleneck_forward.4} parent=35 // pred_check_branch
        %1113 = sbr.rel (%p1111) target = $region44
      $region43: #{bottleneck_forward.4} parent=35 // pred_region
        %s1114 = smul.u32 8, %s22
      $region44: #{bottleneck_forward.4} parent=35 // pred_fallthru
        _
    $region36: #{bottleneck_forward.4} parent=5 // pred_fallthru
      _
    %p1115 = scmp.le.s32.totalorder 2, %s10
    // Predicated region
    $region45: #{bottleneck_forward.4} parent=5 // pred_check
      %p1116 = pneg %p1115
    $region46: #{bottleneck_forward.4} parent=5 // pred_check_branch
      %1118 = sbr.rel (%p1116) target = $region48
    $region47: #{bottleneck_forward.4} parent=5 // pred_region
      %s1119 = ssub.s32 %s10, 2
      // Predicated region
      $region49: #{bottleneck_forward.4} parent=47 // pred_check
        %p1120 = pneg %p168
      $region50: #{bottleneck_forward.4} parent=47 // pred_check_branch
        %1122 = sbr.rel (%p1120) target = $region52
      $region51: #{bottleneck_forward.4} parent=47 // pred_region
        %s1123 = smul.u32 8, %s25
        %p1124 = scmp.lt.s32.totalorder %s23, 1
        %s1125 = scalar_select %p1124, %s23, 1
        %p1126 = scmp.lt.s32.totalorder %s1123, 15
        %s1127 = scalar_select %p1126, %s1123, 15
        %p1128 = scmp.lt.s32.totalorder %s24, 0
        %s1129 = scalar_select %p1128, %s24, 0
        %s1130 = smul.addr %s1127, 2
        %s1131 = sadd.s32 %s1129, %s1130
        %s1132 = smul.addr %s1125, 32
        %s1133 = sadd.s32 %s1131, %s1132
        %s1134 = smul.addr %s1133, 4
        %s1135 = scalar_lea.vmem %s4, %s1134
      $region52: #{bottleneck_forward.4} parent=47 // pred_fallthru
        _
    $region48: #{bottleneck_forward.4} parent=5 // pred_fallthru
      _
  $region6: #{bottleneck_forward.4} parent=0 // loop_footer
    %s14 = sadd.s32 1, %s10
  $region7: #{bottleneck_forward.4} parent=0 // loop_footer_branch
    %9 = sbr.rel target = $region3
  $region8: #{bottleneck_forward.4} parent=0 // loop_exit
    _

</llo_original>
